<compile_context>
chip_gen: v5e
topology: v5e:2x2
jax: 0.10.0
libtpu: 0.0.40
codegen_flags: <defaults>
</compile_context>

<pallas_src>
import jax
import jax.numpy as jnp
from jax.experimental import pallas as pl
from jax.experimental.pallas import tpu as pltpu

FEATURE_DIM = 1536
HIDDEN_DIM = 512
NUM_CLASSES = 5
N_PAD = 128          # lane-dense padded output width of the second Linear
MAX_TILE_B = 1024    # cap on the batch tile (working set ~10-12 MiB at 1024)
MIN_TILE_B = 128     # below this, a single full-batch block is used
TARGET_STEPS = 4     # aim for >=4 grid steps when B is large (v7x: 2 TCs x 2)


# ----------------------------------------------------------------------------
# Pallas kernel: fused two-layer MLP head (the hot path).
# ----------------------------------------------------------------------------
def _mlp_head_kernel(f_ref, w1_ref, b1_ref, w2_ref, b2_ref, o_ref):
    # f_ref : (tb, 1536) f32/bf16    w1_ref: (1536, 512) bf16   b1_ref: (1, 512) f32
    # w2_ref: (512, 128) bf16        b2_ref: (1, 128) f32       o_ref : (tb, 128)
    # In-kernel cast rides the VPU under MXU work (no standalone HBM cast pass).
    f = f_ref[...].astype(jnp.bfloat16)
    # Layer 1: Linear(1536 -> 512), bf16 operands, f32 MXU accumulation.
    h = jnp.dot(f, w1_ref[...], preferred_element_type=jnp.float32)
    # Bias + ReLU in f32 on the VPU.
    h = jnp.maximum(h + b1_ref[...], 0.0)
    # Dropout(p=0.3): eval-mode identity (inference semantics).
    # TODO(synk): training-mode dropout (pltpu.prng_*) intentionally omitted.
    # Layer 2: Linear(512 -> 128 lane-padded), bf16 operands, f32 accumulation.
    out = jnp.dot(h.astype(jnp.bfloat16), w2_ref[...],
                  preferred_element_type=jnp.float32)
    o_ref[...] = (out + b2_ref[...]).astype(o_ref.dtype)


# ----------------------------------------------------------------------------
# One-time parameter prep (hoisted out of the per-call path).
# ----------------------------------------------------------------------------
def prepare_head_params(w1, b1, w2, b2):
    """Cast weights to bf16 and lane-pad the classifier (5 -> 128) once."""
    n_cls = w2.shape[1]
    w2_p = jnp.zeros((HIDDEN_DIM, N_PAD), jnp.float32).at[:, :n_cls].set(w2)
    b2_p = jnp.zeros((1, N_PAD), jnp.float32).at[:, :n_cls].set(b2.reshape(1, -1))
    return (w1.astype(jnp.bfloat16),
            b1.reshape(1, -1).astype(jnp.float32),
            w2_p.astype(jnp.bfloat16),
            b2_p,
            n_cls)


def _pick_batch_tile(B):
    """Batch tile: full batch when small; else >=TARGET_STEPS steps, tile<=1024."""
    if B <= MIN_TILE_B:
        return B                          # block == full dim is always legal
    tb = -(-B // TARGET_STEPS)            # ceil(B / TARGET_STEPS)
    tb = ((tb + 127) // 128) * 128        # MXU/layout-friendly multiple of 128
    return max(MIN_TILE_B, min(MAX_TILE_B, tb))


def classification_head(features, head_params, *, out_dtype=jnp.float32):
    """features: (B, 1536) f32 or bf16 -> logits (B, num_classes) in out_dtype.

    out_dtype=jnp.bfloat16 halves logits writeback (useful on memory-bound v6e).
    """
    w1_bf16, b1_f32, w2_bf16, b2_f32, n_cls = head_params
    B = features.shape[0]
    tb = _pick_batch_tile(B)
    # Uneven last tile is handled by Pallas boundary masking -- no jnp.pad
    # round-trip of the feature matrix through HBM.
    grid = (pl.cdiv(B, tb),)

    flops = 2 * B * FEATURE_DIM * HIDDEN_DIM + 2 * B * HIDDEN_DIM * N_PAD
    bytes_accessed = (
        B * FEATURE_DIM * features.dtype.itemsize    # features
        + FEATURE_DIM * HIDDEN_DIM * 2               # w1 (bf16)
        + HIDDEN_DIM * 4                             # b1 (f32)
        + HIDDEN_DIM * N_PAD * 2                     # w2 padded (bf16)
        + N_PAD * 4                                  # b2 padded (f32)
        + B * N_PAD * jnp.dtype(out_dtype).itemsize  # output
    )

    # Weights/biases: constant index_map (fetched once, VMEM-resident) and
    # single-buffered -- returns the needless double-buffer VMEM.
    def resident(shape):
        return pl.BlockSpec(shape, lambda i: (0, 0), pipeline_mode=pl.Buffered(1))

    out = pl.pallas_call(
        _mlp_head_kernel,
        out_shape=jax.ShapeDtypeStruct((B, N_PAD), out_dtype),
        grid=grid,
        in_specs=[
            pl.BlockSpec((tb, FEATURE_DIM), lambda i: (i, 0)),  # features: batch-tiled
            resident((FEATURE_DIM, HIDDEN_DIM)),                # w1
            resident((1, HIDDEN_DIM)),                          # b1
            resident((HIDDEN_DIM, N_PAD)),                      # w2 (lane-padded)
            resident((1, N_PAD)),                               # b2 (lane-padded)
        ],
        out_specs=pl.BlockSpec((tb, N_PAD), lambda i: (i, 0)),
        compiler_params=pltpu.CompilerParams(
            dimension_semantics=("parallel",),
            # ~10-12 MiB working set at tb=1024; 32 MiB fits every generation
            # (incl. v7x's 64 MiB physical / 32 MiB default scoped VMEM).
            vmem_limit_bytes=32 << 20,
        ),
        cost_estimate=pl.CostEstimate(
            flops=flops, transcendentals=0, bytes_accessed=bytes_accessed),
    )(features, w1_bf16, b1_f32, w2_bf16, b2_f32)

    # Strip the lane padding of the classifier output.
    return out[:, :n_cls]


# ----------------------------------------------------------------------------
# Backbone stand-in (plain-JAX glue).
# ----------------------------------------------------------------------------
def fake_backbone_features(x, proj):
    # TODO(synk): the real pre-trained backbone.forward_features()['x_norm_clstoken']
    #             has no Pallas equivalent here; replaced by a deterministic
    #             linear projection.  For small-batch serving the head should be
    #             fused into (or weight-prefetched behind) the real backbone.
    B = x.shape[0]
    flat = x.reshape(B, -1)
    # Producer emits bf16 directly (fused cast) -> halves the head's feature DMA.
    return (flat @ proj).astype(jnp.bfloat16)


# ----------------------------------------------------------------------------
# Deterministic parameter init (shapes from the module's __init__).
# ----------------------------------------------------------------------------
def init_params(key, in_flat_dim):
    k0, k1, k2, k3, k4 = jax.random.split(key, 5)
    proj = jax.random.normal(k0, (in_flat_dim, FEATURE_DIM), jnp.float32) * 0.02
    w1 = jax.random.normal(k1, (FEATURE_DIM, HIDDEN_DIM), jnp.float32) * 0.02
    b1 = jax.random.normal(k2, (1, HIDDEN_DIM), jnp.float32) * 0.01
    w2 = jax.random.normal(k3, (HIDDEN_DIM, NUM_CLASSES), jnp.float32) * 0.02
    b2 = jax.random.normal(k4, (1, NUM_CLASSES), jnp.float32) * 0.01
    return proj, w1, b1, w2, b2


def reference_forward_matched(features, w1, b1, w2, b2):
    # Same numerics as the kernel: bf16 operands, f32 acc, f32 epilogue.
    f = features.astype(jnp.bfloat16)
    h = jnp.dot(f, w1.astype(jnp.bfloat16), preferred_element_type=jnp.float32)
    h = jnp.maximum(h + b1.reshape(1, -1), 0.0)
    out = jnp.dot(h.astype(jnp.bfloat16), w2.astype(jnp.bfloat16),
                  preferred_element_type=jnp.float32)
    return out + b2.reshape(1, -1)


def reference_forward_f32(features, w1, b1, w2, b2):
    # Pure-f32 reference (parity with the original f32 PyTorch head; looser tol).
    f = features.astype(jnp.float32)
    h = jnp.maximum(f @ w1 + b1.reshape(1, -1), 0.0)
    return h @ w2 + b2.reshape(1, -1)


if __name__ == "__main__":
    key = jax.random.PRNGKey(0)
    kx, kp = jax.random.split(key)

    # Small deterministic example input: batch=2, channels=3, spatial=16x16 (NCHW).
    B, C, H, W = 2, 3, 16, 16
    x = jax.random.normal(kx, (B, C, H, W), jnp.float32)

    proj, w1, b1, w2, b2 = init_params(kp, C * H * W)
    head_params = prepare_head_params(w1, b1, w2, b2)   # one-time prep

    # Backbone stand-in (glue), then the Pallas MLP head (hot path).
    features = fake_backbone_features(x, proj)           # (B, 1536) bf16
    logits = classification_head(features, head_params)  # (B, 5) f32
    logits = jax.block_until_ready(logits)

    # Checks: (a) matched-numerics reference (tight), (b) pure-f32 reference (loose).
    ref = reference_forward_matched(features, w1, b1, w2, b2)
    ref32 = reference_forward_f32(features, w1, b1, w2, b2)
    assert logits.shape == (B, NUM_CLASSES)
    assert jnp.allclose(logits, ref, atol=1e-3, rtol=1e-3), "mismatch vs matched ref"
    assert jnp.allclose(logits, ref32, atol=2e-2, rtol=2e-2), "mismatch vs f32 ref"

    print("KERNEL_OK")
</pallas_src>

<mosaic_0001>
module attributes {stable_mosaic.version = 11 : i64} {
  func.func @_mlp_head_kernel(%arg0: i32, %arg1: memref<2x1536xbf16, #tpu.memory_space<vmem>>, %arg2: memref<1536x512xbf16, #tpu.memory_space<vmem>>, %arg3: memref<1x512xf32, #tpu.memory_space<vmem>>, %arg4: memref<512x128xbf16, #tpu.memory_space<vmem>>, %arg5: memref<1x128xf32, #tpu.memory_space<vmem>>, %arg6: memref<2x128xf32, #tpu.memory_space<vmem>>) attributes {dimension_semantics = [#tpu.dimension_semantics<parallel>], iteration_bounds = array<i64: 1>, scalar_prefetch = 0 : i64, scratch_operands = 0 : i64, tpu.core_type = #tpu.core_type<tc>, window_params = [{transform_indices = @transform_0, window_bounds = array<i64: 2, 1536>}, {pipeline_mode = #tpu.pipeline_mode<synchronous>, transform_indices = @transform_1, window_bounds = array<i64: 1536, 512>}, {pipeline_mode = #tpu.pipeline_mode<synchronous>, transform_indices = @transform_2, window_bounds = array<i64: 1, 512>}, {pipeline_mode = #tpu.pipeline_mode<synchronous>, transform_indices = @transform_3, window_bounds = array<i64: 512, 128>}, {pipeline_mode = #tpu.pipeline_mode<synchronous>, transform_indices = @transform_4, window_bounds = array<i64: 1, 128>}, {transform_indices = @transform_5, window_bounds = array<i64: 2, 128>}]} {
    %c0 = arith.constant 0 : index
    %c0_0 = arith.constant 0 : index
    %0 = vector.load %arg1[%c0, %c0_0] : memref<2x1536xbf16, #tpu.memory_space<vmem>>, vector<2x1536xbf16>
    %c0_1 = arith.constant 0 : index
    %c0_2 = arith.constant 0 : index
    %1 = vector.load %arg2[%c0_1, %c0_2] : memref<1536x512xbf16, #tpu.memory_space<vmem>>, vector<1536x512xbf16>
    %cst = arith.constant dense<0.000000e+00> : vector<2x512xf32>
    %2 = tpu.matmul %0, %1, %cst {dimension_numbers = #tpu.dot_dimension_numbers<[1], [0], [0], [1], [0, 0, 1, 1], [], []>} : vector<2x1536xbf16>, vector<1536x512xbf16>, vector<2x512xf32> -> vector<2x512xf32>
    %c0_3 = arith.constant 0 : index
    %c0_4 = arith.constant 0 : index
    %3 = vector.load %arg3[%c0_3, %c0_4] : memref<1x512xf32, #tpu.memory_space<vmem>>, vector<1x512xf32>
    %4 = vector.broadcast %3 : vector<1x512xf32> to vector<2x512xf32>
    %5 = arith.addf %2, %4 : vector<2x512xf32>
    %cst_5 = arith.constant 0.000000e+00 : f32
    %6 = vector.broadcast %cst_5 : f32 to vector<2x512xf32>
    %7 = arith.maximumf %5, %6 : vector<2x512xf32>
    %8 = arith.truncf %7 : vector<2x512xf32> to vector<2x512xbf16>
    %c0_6 = arith.constant 0 : index
    %c0_7 = arith.constant 0 : index
    %9 = vector.load %arg4[%c0_6, %c0_7] : memref<512x128xbf16, #tpu.memory_space<vmem>>, vector<512x128xbf16>
    %cst_8 = arith.constant dense<0.000000e+00> : vector<2x128xf32>
    %10 = tpu.matmul %8, %9, %cst_8 {dimension_numbers = #tpu.dot_dimension_numbers<[1], [0], [0], [1], [0, 0, 1, 1], [], []>} : vector<2x512xbf16>, vector<512x128xbf16>, vector<2x128xf32> -> vector<2x128xf32>
    %c0_9 = arith.constant 0 : index
    %c0_10 = arith.constant 0 : index
    %11 = vector.load %arg5[%c0_9, %c0_10] : memref<1x128xf32, #tpu.memory_space<vmem>>, vector<1x128xf32>
    %12 = vector.broadcast %11 : vector<1x128xf32> to vector<2x128xf32>
    %13 = arith.addf %10, %12 : vector<2x128xf32>
    %c0_11 = arith.constant 0 : index
    %c0_12 = arith.constant 0 : index
    %14 = vector.load %arg6[%c0_11, %c0_12] : memref<2x128xf32, #tpu.memory_space<vmem>>, vector<2x128xf32>
    tpu.vector_store %arg6[%c0_11, %c0_12], %13 {strides = array<i32>} : memref<2x128xf32, #tpu.memory_space<vmem>>, vector<2x128xf32>,
    return
  }
  func.func @transform_0(%arg0: i32) -> (i32, i32) {
    %c0_i32 = arith.constant 0 : i32
    %c0_i32_0 = arith.constant 0 : i32
    return %arg0, %c0_i32 : i32, i32
  }
  func.func @transform_1(%arg0: i32) -> (i32, i32) {
    %c0_i32 = arith.constant 0 : i32
    %c0_i32_0 = arith.constant 0 : i32
    %c0_i32_1 = arith.constant 0 : i32
    return %c0_i32, %c0_i32_0 : i32, i32
  }
  func.func @transform_2(%arg0: i32) -> (i32, i32) {
    %c0_i32 = arith.constant 0 : i32
    %c0_i32_0 = arith.constant 0 : i32
    %c0_i32_1 = arith.constant 0 : i32
    return %c0_i32, %c0_i32_0 : i32, i32
  }
  func.func @transform_3(%arg0: i32) -> (i32, i32) {
    %c0_i32 = arith.constant 0 : i32
    %c0_i32_0 = arith.constant 0 : i32
    %c0_i32_1 = arith.constant 0 : i32
    return %c0_i32, %c0_i32_0 : i32, i32
  }
  func.func @transform_4(%arg0: i32) -> (i32, i32) {
    %c0_i32 = arith.constant 0 : i32
    %c0_i32_0 = arith.constant 0 : i32
    %c0_i32_1 = arith.constant 0 : i32
    return %c0_i32, %c0_i32_0 : i32, i32
  }
  func.func @transform_5(%arg0: i32) -> (i32, i32) {
    %c0_i32 = arith.constant 0 : i32
    %c0_i32_0 = arith.constant 0 : i32
    return %arg0, %c0_i32 : i32, i32
  }
}

</mosaic_0001>

<llo_original>
// kernel: tpu_custom_call.1
$region0: #{tpu_custom_call.1}
  #allocation0 [shape = 'u32[]', space=smem, size = 0x4, offset = 0x4, fixed_abs, tag = 'smem constant byte address 0x4 - core index']
  #allocation1 [shape = 'u32[72,128]{1,0:T(1,128)}', space=vmem, size = 0x9000, scoped, tag = 'internal scratch']
  %s0 = inlined_call_operand.hbm [shape: bf16[2,1536], index: 0, kind: input, shape index: {}]
  %s1 = inlined_call_operand.hbm [shape: bf16[1536,512], index: 1, kind: input, shape index: {}]
  %s2 = inlined_call_operand.hbm [shape: f32[1,512], index: 2, kind: input, shape index: {}]
  %s3 = inlined_call_operand.hbm [shape: bf16[512,128], index: 3, kind: input, shape index: {}]
  %s4 = inlined_call_operand.hbm [shape: f32[1,128], index: 4, kind: input, shape index: {}]
  %s5 = inlined_call_operand.hbm [shape: f32[2,128], index: 5, kind: output, shape index: {}]
  %s6 = sld [smem:[#allocation0]]
  $region50: #{tpu_custom_call.1} parent=0
    _
  %s8 = ssub.s32 1, %s6
  %s9 = scalar_select 0, %s8, %s6
  $region1: #{tpu_custom_call.1} parent=0
    #allocation2 [shape = 'u8[6144]{0}', space=vmem, size = 0x1800, scoped, tag = 'input window, operand 0, single buffered']
    #allocation3 [shape = 's32[1]{0}', space=sflag, size = 0x4, scoped, tag = 'scoped memory for tpu_custom_call.1']
    #allocation4 [shape = 's32[1]{0}', space=sflag, size = 0x4, scoped, tag = 'scoped memory for tpu_custom_call.1']
    #allocation5 [shape = 'u8[1572864]{0}', space=vmem, size = 0x180000, scoped, tag = 'input window, operand 1, single buffered']
    #allocation6 [shape = 's32[1]{0}', space=sflag, size = 0x4, scoped, tag = 'scoped memory for tpu_custom_call.1']
    #allocation7 [shape = 'u8[2048]{0}', space=vmem, size = 0x800, scoped, tag = 'input window, operand 2, single buffered']
    #allocation8 [shape = 'u8[131072]{0}', space=vmem, size = 0x20000, scoped, tag = 'input window, operand 3, single buffered']
    #allocation9 [shape = 's32[1]{0}', space=sflag, size = 0x4, scoped, tag = 'scoped memory for tpu_custom_call.1']
    #allocation10 [shape = 'u8[512]{0}', space=vmem, size = 0x400, scoped, tag = 'input window, operand 4, single buffered']
    #allocation11 [shape = 'u8[1024]{0}', space=vmem, size = 0x400, scoped, tag = 'output window, operand 0, single buffered']
    %10 = vsyncpa [#allocation3], 0
    %11 = vsyncpa [#allocation6], 0
    %12 = vsyncpa [#allocation9], 0
    %13 = vsyncpa [#allocation4], 0
    // Predicated region
    $region2: #{tpu_custom_call.1} parent=1 // pred_check
      _
    $region3: #{tpu_custom_call.1} parent=1 // pred_check_branch
      %15 = sbr.rel (0) target = $region5
    $region4: #{tpu_custom_call.1} parent=1 // pred_region
      %17 = vsyncadd [#allocation3], 0
      %s19 = sshll.u32 %s0, 4
      %s20 = int_to_ptr.hbm [resolvable:$true] %s19
      %s21 = sshll.u32 [#allocation2], 4
      %s22 = int_to_ptr.vmem [resolvable:$true] %s21
      %24 = dma.hbm_to_vmem [thread:$0]  %s20, 192, %s22, [#allocation3]
    $region5: #{tpu_custom_call.1} parent=1 // pred_fallthru
      _
    // Predicated region
    $region6: #{tpu_custom_call.1} parent=1 // pred_check
      _
    $region7: #{tpu_custom_call.1} parent=1 // pred_check_branch
      %26 = sbr.rel (0) target = $region9
    $region8: #{tpu_custom_call.1} parent=1 // pred_region
      %28 = vsyncadd [#allocation6], 0
      %s29 = sshll.u32 %s1, 4
      %s30 = int_to_ptr.hbm [resolvable:$true] %s29
      %s31 = sshll.u32 [#allocation5], 4
      %s32 = int_to_ptr.vmem [resolvable:$true] %s31
      %37 = dma.hbm_to_vmem [thread:$0]  %s30, 49152, %s32, [#allocation6], 256, 256, 16
    $region9: #{tpu_custom_call.1} parent=1 // pred_fallthru
      _
    // Predicated region
    $region10: #{tpu_custom_call.1} parent=1 // pred_check
      _
    $region11: #{tpu_custom_call.1} parent=1 // pred_check_branch
      %39 = sbr.rel (0) target = $region13
    $region12: #{tpu_custom_call.1} parent=1 // pred_region
      %41 = vsyncadd [#allocation6], 0
      %s43 = sshll.u32 %s2, 4
      %s44 = int_to_ptr.hbm [resolvable:$true] %s43
      %s45 = sshll.u32 [#allocation7], 4
      %s46 = int_to_ptr.vmem [resolvable:$true] %s45
      %48 = dma.hbm_to_vmem [thread:$0]  %s44, 64, %s46, [#allocation6]
    $region13: #{tpu_custom_call.1} parent=1 // pred_fallthru
      _
    // Predicated region
    $region14: #{tpu_custom_call.1} parent=1 // pred_check
      _
    $region15: #{tpu_custom_call.1} parent=1 // pred_check_branch
      %50 = sbr.rel (0) target = $region17
    $region16: #{tpu_custom_call.1} parent=1 // pred_region
      %52 = vsyncadd [#allocation9], 0
      %s53 = sshll.u32 %s3, 4
      %s54 = int_to_ptr.hbm [resolvable:$true] %s53
      %s55 = sshll.u32 [#allocation8], 4
      %s56 = int_to_ptr.vmem [resolvable:$true] %s55
      %61 = dma.hbm_to_vmem [thread:$0]  %s54, 4096, %s56, [#allocation9], 64, 64, 4
    $region17: #{tpu_custom_call.1} parent=1 // pred_fallthru
      _
    // Predicated region
    $region18: #{tpu_custom_call.1} parent=1 // pred_check
      _
    $region19: #{tpu_custom_call.1} parent=1 // pred_check_branch
      %63 = sbr.rel (0) target = $region21
    $region20: #{tpu_custom_call.1} parent=1 // pred_region
      %65 = vsyncadd [#allocation9], 0
      %s67 = sshll.u32 %s4, 4
      %s68 = int_to_ptr.hbm [resolvable:$true] %s67
      %s69 = sshll.u32 [#allocation10], 4
      %s70 = int_to_ptr.vmem [resolvable:$true] %s69
      %72 = dma.hbm_to_vmem [thread:$0]  %s68, 16, %s70, [#allocation9]
    $region21: #{tpu_custom_call.1} parent=1 // pred_fallthru
      _
    // Predicated region
    $region22: #{tpu_custom_call.1} parent=1 // pred_check
      _
    $region23: #{tpu_custom_call.1} parent=1 // pred_check_branch
      %74 = sbr.rel (0) target = $region25
    $region24: #{tpu_custom_call.1} parent=1 // pred_region
      %76 = dma.done [#allocation3], 192
    $region25: #{tpu_custom_call.1} parent=1 // pred_fallthru
      _
    // Predicated region
    $region26: #{tpu_custom_call.1} parent=1 // pred_check
      _
    $region27: #{tpu_custom_call.1} parent=1 // pred_check_branch
      %78 = sbr.rel (0) target = $region29
    $region28: #{tpu_custom_call.1} parent=1 // pred_region
      %80 = dma.done [#allocation6], 49152
    $region29: #{tpu_custom_call.1} parent=1 // pred_fallthru
      _
    // Predicated region
    $region30: #{tpu_custom_call.1} parent=1 // pred_check
      _
    $region31: #{tpu_custom_call.1} parent=1 // pred_check_branch
      %82 = sbr.rel (0) target = $region33
    $region32: #{tpu_custom_call.1} parent=1 // pred_region
      %84 = dma.done [#allocation6], 64
    $region33: #{tpu_custom_call.1} parent=1 // pred_fallthru
      _
    // Predicated region
    $region34: #{tpu_custom_call.1} parent=1 // pred_check
      _
    $region35: #{tpu_custom_call.1} parent=1 // pred_check_branch
      %86 = sbr.rel (0) target = $region37
    $region36: #{tpu_custom_call.1} parent=1 // pred_region
      %88 = dma.done [#allocation9], 4096
    $region37: #{tpu_custom_call.1} parent=1 // pred_fallthru
      _
    // Predicated region
    $region38: #{tpu_custom_call.1} parent=1 // pred_check
      _
    $region39: #{tpu_custom_call.1} parent=1 // pred_check_branch
      %90 = sbr.rel (0) target = $region41
    $region40: #{tpu_custom_call.1} parent=1 // pred_region
      %92 = dma.done [#allocation9], 16
    $region41: #{tpu_custom_call.1} parent=1 // pred_fallthru
      _
    %v93 = vld [vmem:[#allocation2] sm:$0xff]
    %v94 = vld [vmem:[#allocation2 + $0x8] sm:$0xf]
    %v95 = vld [vmem:[#allocation5] sm:$0xff]
    %v96 = vld [vmem:[#allocation5 + $0x8] sm:$0xff]
    %v97 = vld [vmem:[#allocation5 + $0x10] sm:$0xff]
    %v98 = vld [vmem:[#allocation5 + $0x18] sm:$0xff]
    %v99 = vld [vmem:[#allocation5 + $0x20] sm:$0xff]
    %v100 = vld [vmem:[#allocation5 + $0x28] sm:$0xff]
    %v101 = vld [vmem:[#allocation5 + $0x30] sm:$0xff]
    %v102 = vld [vmem:[#allocation5 + $0x38] sm:$0xff]
    %v103 = vld [vmem:[#allocation5 + $0x40] sm:$0xff]
    %v104 = vld [vmem:[#allocation5 + $0x48] sm:$0xff]
    %v105 = vld [vmem:[#allocation5 + $0x50] sm:$0xff]
    %v106 = vld [vmem:[#allocation5 + $0x58] sm:$0xff]
    %v107 = vld [vmem:[#allocation5 + $0x60] sm:$0xff]
    %v108 = vld [vmem:[#allocation5 + $0x68] sm:$0xff]
    %v109 = vld [vmem:[#allocation5 + $0x70] sm:$0xff]
    %v110 = vld [vmem:[#allocation5 + $0x78] sm:$0xff]
    %v111 = vld [vmem:[#allocation5 + $0x80] sm:$0xff]
    %v112 = vld [vmem:[#allocation5 + $0x88] sm:$0xff]
    %v113 = vld [vmem:[#allocation5 + $0x90] sm:$0xff]
    %v114 = vld [vmem:[#allocation5 + $0x98] sm:$0xff]
    %v115 = vld [vmem:[#allocation5 + $0xa0] sm:$0xff]
    %v116 = vld [vmem:[#allocation5 + $0xa8] sm:$0xff]
    %v117 = vld [vmem:[#allocation5 + $0xb0] sm:$0xff]
    %v118 = vld [vmem:[#allocation5 + $0xb8] sm:$0xff]
    %v119 = vld [vmem:[#allocation5 + $0xc0] sm:$0xff]
    %v120 = vld [vmem:[#allocation5 + $0xc8] sm:$0xff]
    %v121 = vld [vmem:[#allocation5 + $0xd0] sm:$0xff]
    %v122 = vld [vmem:[#allocation5 + $0xd8] sm:$0xff]
    %v123 = vld [vmem:[#allocation5 + $0xe0] sm:$0xff]
    %v124 = vld [vmem:[#allocation5 + $0xe8] sm:$0xff]
    %v125 = vld [vmem:[#allocation5 + $0xf0] sm:$0xff]
    %v126 = vld [vmem:[#allocation5 + $0xf8] sm:$0xff]
    %v127 = vld [vmem:[#allocation5 + $0x100] sm:$0xff]
    %v128 = vld [vmem:[#allocation5 + $0x108] sm:$0xff]
    %v129 = vld [vmem:[#allocation5 + $0x110] sm:$0xff]
    %v130 = vld [vmem:[#allocation5 + $0x118] sm:$0xff]
    %v131 = vld [vmem:[#allocation5 + $0x120] sm:$0xff]
    %v132 = vld [vmem:[#allocation5 + $0x128] sm:$0xff]
    %v133 = vld [vmem:[#allocation5 + $0x130] sm:$0xff]
    %v134 = vld [vmem:[#allocation5 + $0x138] sm:$0xff]
    %v135 = vld [vmem:[#allocation5 + $0x140] sm:$0xff]
    %v136 = vld [vmem:[#allocation5 + $0x148] sm:$0xff]
    %v137 = vld [vmem:[#allocation5 + $0x150] sm:$0xff]
    %v138 = vld [vmem:[#allocation5 + $0x158] sm:$0xff]
    %v139 = vld [vmem:[#allocation5 + $0x160] sm:$0xff]
    %v140 = vld [vmem:[#allocation5 + $0x168] sm:$0xff]
    %v141 = vld [vmem:[#allocation5 + $0x170] sm:$0xff]
    %v142 = vld [vmem:[#allocation5 + $0x178] sm:$0xff]
    %v143 = vld [vmem:[#allocation5 + $0x180] sm:$0xff]
    %v144 = vld [vmem:[#allocation5 + $0x188] sm:$0xff]
    %v145 = vld [vmem:[#allocation5 + $0x190] sm:$0xff]
    %v146 = vld [vmem:[#allocation5 + $0x198] sm:$0xff]
    %v147 = vld [vmem:[#allocation5 + $0x1a0] sm:$0xff]
    %v148 = vld [vmem:[#allocation5 + $0x1a8] sm:$0xff]
    %v149 = vld [vmem:[#allocation5 + $0x1b0] sm:$0xff]
    %v150 = vld [vmem:[#allocation5 + $0x1b8] sm:$0xff]
    %v151 = vld [vmem:[#allocation5 + $0x1c0] sm:$0xff]
    %v152 = vld [vmem:[#allocation5 + $0x1c8] sm:$0xff]
    %v153 = vld [vmem:[#allocation5 + $0x1d0] sm:$0xff]
    %v154 = vld [vmem:[#allocation5 + $0x1d8] sm:$0xff]
    %v155 = vld [vmem:[#allocation5 + $0x1e0] sm:$0xff]
    %v156 = vld [vmem:[#allocation5 + $0x1e8] sm:$0xff]
    %v157 = vld [vmem:[#allocation5 + $0x1f0] sm:$0xff]
    %v158 = vld [vmem:[#allocation5 + $0x1f8] sm:$0xff]
    %v159 = vld [vmem:[#allocation5 + $0x200] sm:$0xff]
    %v160 = vld [vmem:[#allocation5 + $0x208] sm:$0xff]
    %v161 = vld [vmem:[#allocation5 + $0x210] sm:$0xff]
    %v162 = vld [vmem:[#allocation5 + $0x218] sm:$0xff]
    %v163 = vld [vmem:[#allocation5 + $0x220] sm:$0xff]
    %v164 = vld [vmem:[#allocation5 + $0x228] sm:$0xff]
    %v165 = vld [vmem:[#allocation5 + $0x230] sm:$0xff]
    %v166 = vld [vmem:[#allocation5 + $0x238] sm:$0xff]
    %v167 = vld [vmem:[#allocation5 + $0x240] sm:$0xff]
    %v168 = vld [vmem:[#allocation5 + $0x248] sm:$0xff]
    %v169 = vld [vmem:[#allocation5 + $0x250] sm:$0xff]
    %v170 = vld [vmem:[#allocation5 + $0x258] sm:$0xff]
    %v171 = vld [vmem:[#allocation5 + $0x260] sm:$0xff]
    %v172 = vld [vmem:[#allocation5 + $0x268] sm:$0xff]
    %v173 = vld [vmem:[#allocation5 + $0x270] sm:$0xff]
    %v174 = vld [vmem:[#allocation5 + $0x278] sm:$0xff]
    %v175 = vld [vmem:[#allocation5 + $0x280] sm:$0xff]
    %v176 = vld [vmem:[#allocation5 + $0x288] sm:$0xff]
    %v177 = vld [vmem:[#allocation5 + $0x290] sm:$0xff]
    %v178 = vld [vmem:[#allocation5 + $0x298] sm:$0xff]
    %v179 = vld [vmem:[#allocation5 + $0x2a0] sm:$0xff]
    %v180 = vld [vmem:[#allocation5 + $0x2a8] sm:$0xff]
    %v181 = vld [vmem:[#allocation5 + $0x2b0] sm:$0xff]
    %v182 = vld [vmem:[#allocation5 + $0x2b8] sm:$0xff]
    %v183 = vld [vmem:[#allocation5 + $0x2c0] sm:$0xff]
    %v184 = vld [vmem:[#allocation5 + $0x2c8] sm:$0xff]
    %v185 = vld [vmem:[#allocation5 + $0x2d0] sm:$0xff]
    %v186 = vld [vmem:[#allocation5 + $0x2d8] sm:$0xff]
    %v187 = vld [vmem:[#allocation5 + $0x2e0] sm:$0xff]
    %v188 = vld [vmem:[#allocation5 + $0x2e8] sm:$0xff]
    %v189 = vld [vmem:[#allocation5 + $0x2f0] sm:$0xff]
    %v190 = vld [vmem:[#allocation5 + $0x2f8] sm:$0xff]
    %v191 = vld [vmem:[#allocation5 + $0x300] sm:$0xff]
    %v192 = vld [vmem:[#allocation5 + $0x308] sm:$0xff]
    %v193 = vld [vmem:[#allocation5 + $0x310] sm:$0xff]
    %v194 = vld [vmem:[#allocation5 + $0x318] sm:$0xff]
    %v195 = vld [vmem:[#allocation5 + $0x320] sm:$0xff]
    %v196 = vld [vmem:[#allocation5 + $0x328] sm:$0xff]
    %v197 = vld [vmem:[#allocation5 + $0x330] sm:$0xff]
    %v198 = vld [vmem:[#allocation5 + $0x338] sm:$0xff]
    %v199 = vld [vmem:[#allocation5 + $0x340] sm:$0xff]
    %v200 = vld [vmem:[#allocation5 + $0x348] sm:$0xff]
    %v201 = vld [vmem:[#allocation5 + $0x350] sm:$0xff]
    %v202 = vld [vmem:[#allocation5 + $0x358] sm:$0xff]
    %v203 = vld [vmem:[#allocation5 + $0x360] sm:$0xff]
    %v204 = vld [vmem:[#allocation5 + $0x368] sm:$0xff]
    %v205 = vld [vmem:[#allocation5 + $0x370] sm:$0xff]
    %v206 = vld [vmem:[#allocation5 + $0x378] sm:$0xff]
    %v207 = vld [vmem:[#allocation5 + $0x380] sm:$0xff]
    %v208 = vld [vmem:[#allocation5 + $0x388] sm:$0xff]
    %v209 = vld [vmem:[#allocation5 + $0x390] sm:$0xff]
    %v210 = vld [vmem:[#allocation5 + $0x398] sm:$0xff]
    %v211 = vld [vmem:[#allocation5 + $0x3a0] sm:$0xff]
    %v212 = vld [vmem:[#allocation5 + $0x3a8] sm:$0xff]
    %v213 = vld [vmem:[#allocation5 + $0x3b0] sm:$0xff]
    %v214 = vld [vmem:[#allocation5 + $0x3b8] sm:$0xff]
    %v215 = vld [vmem:[#allocation5 + $0x3c0] sm:$0xff]
    %v216 = vld [vmem:[#allocation5 + $0x3c8] sm:$0xff]
    %v217 = vld [vmem:[#allocation5 + $0x3d0] sm:$0xff]
    %v218 = vld [vmem:[#allocation5 + $0x3d8] sm:$0xff]
    %v219 = vld [vmem:[#allocation5 + $0x3e0] sm:$0xff]
    %v220 = vld [vmem:[#allocation5 + $0x3e8] sm:$0xff]
    %v221 = vld [vmem:[#allocation5 + $0x3f0] sm:$0xff]
    %v222 = vld [vmem:[#allocation5 + $0x3f8] sm:$0xff]
    %v223 = vld [vmem:[#allocation5 + $0x400] sm:$0xff]
    %v224 = vld [vmem:[#allocation5 + $0x408] sm:$0xff]
    %v225 = vld [vmem:[#allocation5 + $0x410] sm:$0xff]
    %v226 = vld [vmem:[#allocation5 + $0x418] sm:$0xff]
    %v227 = vld [vmem:[#allocation5 + $0x420] sm:$0xff]
    %v228 = vld [vmem:[#allocation5 + $0x428] sm:$0xff]
    %v229 = vld [vmem:[#allocation5 + $0x430] sm:$0xff]
    %v230 = vld [vmem:[#allocation5 + $0x438] sm:$0xff]
    %v231 = vld [vmem:[#allocation5 + $0x440] sm:$0xff]
    %v232 = vld [vmem:[#allocation5 + $0x448] sm:$0xff]
    %v233 = vld [vmem:[#allocation5 + $0x450] sm:$0xff]
    %v234 = vld [vmem:[#allocation5 + $0x458] sm:$0xff]
    %v235 = vld [vmem:[#allocation5 + $0x460] sm:$0xff]
    %v236 = vld [vmem:[#allocation5 + $0x468] sm:$0xff]
    %v237 = vld [vmem:[#allocation5 + $0x470] sm:$0xff]
    %v238 = vld [vmem:[#allocation5 + $0x478] sm:$0xff]
    %v239 = vld [vmem:[#allocation5 + $0x480] sm:$0xff]
    %v240 = vld [vmem:[#allocation5 + $0x488] sm:$0xff]
    %v241 = vld [vmem:[#allocation5 + $0x490] sm:$0xff]
    %v242 = vld [vmem:[#allocation5 + $0x498] sm:$0xff]
    %v243 = vld [vmem:[#allocation5 + $0x4a0] sm:$0xff]
    %v244 = vld [vmem:[#allocation5 + $0x4a8] sm:$0xff]
    %v245 = vld [vmem:[#allocation5 + $0x4b0] sm:$0xff]
    %v246 = vld [vmem:[#allocation5 + $0x4b8] sm:$0xff]
    %v247 = vld [vmem:[#allocation5 + $0x4c0] sm:$0xff]
    %v248 = vld [vmem:[#allocation5 + $0x4c8] sm:$0xff]
    %v249 = vld [vmem:[#allocation5 + $0x4d0] sm:$0xff]
    %v250 = vld [vmem:[#allocation5 + $0x4d8] sm:$0xff]
    %v251 = vld [vmem:[#allocation5 + $0x4e0] sm:$0xff]
    %v252 = vld [vmem:[#allocation5 + $0x4e8] sm:$0xff]
    %v253 = vld [vmem:[#allocation5 + $0x4f0] sm:$0xff]
    %v254 = vld [vmem:[#allocation5 + $0x4f8] sm:$0xff]
    %v255 = vld [vmem:[#allocation5 + $0x500] sm:$0xff]
    %v256 = vld [vmem:[#allocation5 + $0x508] sm:$0xff]
    %v257 = vld [vmem:[#allocation5 + $0x510] sm:$0xff]
    %v258 = vld [vmem:[#allocation5 + $0x518] sm:$0xff]
    %v259 = vld [vmem:[#allocation5 + $0x520] sm:$0xff]
    %v260 = vld [vmem:[#allocation5 + $0x528] sm:$0xff]
    %v261 = vld [vmem:[#allocation5 + $0x530] sm:$0xff]
    %v262 = vld [vmem:[#allocation5 + $0x538] sm:$0xff]
    %v263 = vld [vmem:[#allocation5 + $0x540] sm:$0xff]
    %v264 = vld [vmem:[#allocation5 + $0x548] sm:$0xff]
    %v265 = vld [vmem:[#allocation5 + $0x550] sm:$0xff]
    %v266 = vld [vmem:[#allocation5 + $0x558] sm:$0xff]
    %v267 = vld [vmem:[#allocation5 + $0x560] sm:$0xff]
    %v268 = vld [vmem:[#allocation5 + $0x568] sm:$0xff]
    %v269 = vld [vmem:[#allocation5 + $0x570] sm:$0xff]
    %v270 = vld [vmem:[#allocation5 + $0x578] sm:$0xff]
    %v271 = vld [vmem:[#allocation5 + $0x580] sm:$0xff]
    %v272 = vld [vmem:[#allocation5 + $0x588] sm:$0xff]
    %v273 = vld [vmem:[#allocation5 + $0x590] sm:$0xff]
    %v274 = vld [vmem:[#allocation5 + $0x598] sm:$0xff]
    %v275 = vld [vmem:[#allocation5 + $0x5a0] sm:$0xff]
    %v276 = vld [vmem:[#allocation5 + $0x5a8] sm:$0xff]
    %v277 = vld [vmem:[#allocation5 + $0x5b0] sm:$0xff]
    %v278 = vld [vmem:[#allocation5 + $0x5b8] sm:$0xff]
    %v279 = vld [vmem:[#allocation5 + $0x5c0] sm:$0xff]
    %v280 = vld [vmem:[#allocation5 + $0x5c8] sm:$0xff]
    %v281 = vld [vmem:[#allocation5 + $0x5d0] sm:$0xff]
    %v282 = vld [vmem:[#allocation5 + $0x5d8] sm:$0xff]
    %v283 = vld [vmem:[#allocation5 + $0x5e0] sm:$0xff]
    %v284 = vld [vmem:[#allocation5 + $0x5e8] sm:$0xff]
    %v285 = vld [vmem:[#allocation5 + $0x5f0] sm:$0xff]
    %v286 = vld [vmem:[#allocation5 + $0x5f8] sm:$0xff]
    %v287 = vld [vmem:[#allocation5 + $0x600] sm:$0xff]
    %v288 = vld [vmem:[#allocation5 + $0x608] sm:$0xff]
    %v289 = vld [vmem:[#allocation5 + $0x610] sm:$0xff]
    %v290 = vld [vmem:[#allocation5 + $0x618] sm:$0xff]
    %v291 = vld [vmem:[#allocation5 + $0x620] sm:$0xff]
    %v292 = vld [vmem:[#allocation5 + $0x628] sm:$0xff]
    %v293 = vld [vmem:[#allocation5 + $0x630] sm:$0xff]
    %v294 = vld [vmem:[#allocation5 + $0x638] sm:$0xff]
    %v295 = vld [vmem:[#allocation5 + $0x640] sm:$0xff]
    %v296 = vld [vmem:[#allocation5 + $0x648] sm:$0xff]
    %v297 = vld [vmem:[#allocation5 + $0x650] sm:$0xff]
    %v298 = vld [vmem:[#allocation5 + $0x658] sm:$0xff]
    %v299 = vld [vmem:[#allocation5 + $0x660] sm:$0xff]
    %v300 = vld [vmem:[#allocation5 + $0x668] sm:$0xff]
    %v301 = vld [vmem:[#allocation5 + $0x670] sm:$0xff]
    %v302 = vld [vmem:[#allocation5 + $0x678] sm:$0xff]
    %v303 = vld [vmem:[#allocation5 + $0x680] sm:$0xff]
    %v304 = vld [vmem:[#allocation5 + $0x688] sm:$0xff]
    %v305 = vld [vmem:[#allocation5 + $0x690] sm:$0xff]
    %v306 = vld [vmem:[#allocation5 + $0x698] sm:$0xff]
    %v307 = vld [vmem:[#allocation5 + $0x6a0] sm:$0xff]
    %v308 = vld [vmem:[#allocation5 + $0x6a8] sm:$0xff]
    %v309 = vld [vmem:[#allocation5 + $0x6b0] sm:$0xff]
    %v310 = vld [vmem:[#allocation5 + $0x6b8] sm:$0xff]
    %v311 = vld [vmem:[#allocation5 + $0x6c0] sm:$0xff]
    %v312 = vld [vmem:[#allocation5 + $0x6c8] sm:$0xff]
    %v313 = vld [vmem:[#allocation5 + $0x6d0] sm:$0xff]
    %v314 = vld [vmem:[#allocation5 + $0x6d8] sm:$0xff]
    %v315 = vld [vmem:[#allocation5 + $0x6e0] sm:$0xff]
    %v316 = vld [vmem:[#allocation5 + $0x6e8] sm:$0xff]
    %v317 = vld [vmem:[#allocation5 + $0x6f0] sm:$0xff]
    %v318 = vld [vmem:[#allocation5 + $0x6f8] sm:$0xff]
    %v319 = vld [vmem:[#allocation5 + $0x700] sm:$0xff]
    %v320 = vld [vmem:[#allocation5 + $0x708] sm:$0xff]
    %v321 = vld [vmem:[#allocation5 + $0x710] sm:$0xff]
    %v322 = vld [vmem:[#allocation5 + $0x718] sm:$0xff]
    %v323 = vld [vmem:[#allocation5 + $0x720] sm:$0xff]
    %v324 = vld [vmem:[#allocation5 + $0x728] sm:$0xff]
    %v325 = vld [vmem:[#allocation5 + $0x730] sm:$0xff]
    %v326 = vld [vmem:[#allocation5 + $0x738] sm:$0xff]
    %v327 = vld [vmem:[#allocation5 + $0x740] sm:$0xff]
    %v328 = vld [vmem:[#allocation5 + $0x748] sm:$0xff]
    %v329 = vld [vmem:[#allocation5 + $0x750] sm:$0xff]
    %v330 = vld [vmem:[#allocation5 + $0x758] sm:$0xff]
    %v331 = vld [vmem:[#allocation5 + $0x760] sm:$0xff]
    %v332 = vld [vmem:[#allocation5 + $0x768] sm:$0xff]
    %v333 = vld [vmem:[#allocation5 + $0x770] sm:$0xff]
    %v334 = vld [vmem:[#allocation5 + $0x778] sm:$0xff]
    %v335 = vld [vmem:[#allocation5 + $0x780] sm:$0xff]
    %v336 = vld [vmem:[#allocation5 + $0x788] sm:$0xff]
    %v337 = vld [vmem:[#allocation5 + $0x790] sm:$0xff]
    %v338 = vld [vmem:[#allocation5 + $0x798] sm:$0xff]
    %v339 = vld [vmem:[#allocation5 + $0x7a0] sm:$0xff]
    %v340 = vld [vmem:[#allocation5 + $0x7a8] sm:$0xff]
    %v341 = vld [vmem:[#allocation5 + $0x7b0] sm:$0xff]
    %v342 = vld [vmem:[#allocation5 + $0x7b8] sm:$0xff]
    %v343 = vld [vmem:[#allocation5 + $0x7c0] sm:$0xff]
    %v344 = vld [vmem:[#allocation5 + $0x7c8] sm:$0xff]
    %v345 = vld [vmem:[#allocation5 + $0x7d0] sm:$0xff]
    %v346 = vld [vmem:[#allocation5 + $0x7d8] sm:$0xff]
    %v347 = vld [vmem:[#allocation5 + $0x7e0] sm:$0xff]
    %v348 = vld [vmem:[#allocation5 + $0x7e8] sm:$0xff]
    %v349 = vld [vmem:[#allocation5 + $0x7f0] sm:$0xff]
    %v350 = vld [vmem:[#allocation5 + $0x7f8] sm:$0xff]
    %v351 = vld [vmem:[#allocation5 + $0x800] sm:$0xff]
    %v352 = vld [vmem:[#allocation5 + $0x808] sm:$0xff]
    %v353 = vld [vmem:[#allocation5 + $0x810] sm:$0xff]
    %v354 = vld [vmem:[#allocation5 + $0x818] sm:$0xff]
    %v355 = vld [vmem:[#allocation5 + $0x820] sm:$0xff]
    %v356 = vld [vmem:[#allocation5 + $0x828] sm:$0xff]
    %v357 = vld [vmem:[#allocation5 + $0x830] sm:$0xff]
    %v358 = vld [vmem:[#allocation5 + $0x838] sm:$0xff]
    %v359 = vld [vmem:[#allocation5 + $0x840] sm:$0xff]
    %v360 = vld [vmem:[#allocation5 + $0x848] sm:$0xff]
    %v361 = vld [vmem:[#allocation5 + $0x850] sm:$0xff]
    %v362 = vld [vmem:[#allocation5 + $0x858] sm:$0xff]
    %v363 = vld [vmem:[#allocation5 + $0x860] sm:$0xff]
    %v364 = vld [vmem:[#allocation5 + $0x868] sm:$0xff]
    %v365 = vld [vmem:[#allocation5 + $0x870] sm:$0xff]
    %v366 = vld [vmem:[#allocation5 + $0x878] sm:$0xff]
    %v367 = vld [vmem:[#allocation5 + $0x880] sm:$0xff]
    %v368 = vld [vmem:[#allocation5 + $0x888] sm:$0xff]
    %v369 = vld [vmem:[#allocation5 + $0x890] sm:$0xff]
    %v370 = vld [vmem:[#allocation5 + $0x898] sm:$0xff]
    %v371 = vld [vmem:[#allocation5 + $0x8a0] sm:$0xff]
    %v372 = vld [vmem:[#allocation5 + $0x8a8] sm:$0xff]
    %v373 = vld [vmem:[#allocation5 + $0x8b0] sm:$0xff]
    %v374 = vld [vmem:[#allocation5 + $0x8b8] sm:$0xff]
    %v375 = vld [vmem:[#allocation5 + $0x8c0] sm:$0xff]
    %v376 = vld [vmem:[#allocation5 + $0x8c8] sm:$0xff]
    %v377 = vld [vmem:[#allocation5 + $0x8d0] sm:$0xff]
    %v378 = vld [vmem:[#allocation5 + $0x8d8] sm:$0xff]
    %v379 = vld [vmem:[#allocation5 + $0x8e0] sm:$0xff]
    %v380 = vld [vmem:[#allocation5 + $0x8e8] sm:$0xff]
    %v381 = vld [vmem:[#allocation5 + $0x8f0] sm:$0xff]
    %v382 = vld [vmem:[#allocation5 + $0x8f8] sm:$0xff]
    %v383 = vld [vmem:[#allocation5 + $0x900] sm:$0xff]
    %v384 = vld [vmem:[#allocation5 + $0x908] sm:$0xff]
    %v385 = vld [vmem:[#allocation5 + $0x910] sm:$0xff]
    %v386 = vld [vmem:[#allocation5 + $0x918] sm:$0xff]
    %v387 = vld [vmem:[#allocation5 + $0x920] sm:$0xff]
    %v388 = vld [vmem:[#allocation5 + $0x928] sm:$0xff]
    %v389 = vld [vmem:[#allocation5 + $0x930] sm:$0xff]
    %v390 = vld [vmem:[#allocation5 + $0x938] sm:$0xff]
    %v391 = vld [vmem:[#allocation5 + $0x940] sm:$0xff]
    %v392 = vld [vmem:[#allocation5 + $0x948] sm:$0xff]
    %v393 = vld [vmem:[#allocation5 + $0x950] sm:$0xff]
    %v394 = vld [vmem:[#allocation5 + $0x958] sm:$0xff]
    %v395 = vld [vmem:[#allocation5 + $0x960] sm:$0xff]
    %v396 = vld [vmem:[#allocation5 + $0x968] sm:$0xff]
    %v397 = vld [vmem:[#allocation5 + $0x970] sm:$0xff]
    %v398 = vld [vmem:[#allocation5 + $0x978] sm:$0xff]
    %v399 = vld [vmem:[#allocation5 + $0x980] sm:$0xff]
    %v400 = vld [vmem:[#allocation5 + $0x988] sm:$0xff]
    %v401 = vld [vmem:[#allocation5 + $0x990] sm:$0xff]
    %v402 = vld [vmem:[#allocation5 + $0x998] sm:$0xff]
    %v403 = vld [vmem:[#allocation5 + $0x9a0] sm:$0xff]
    %v404 = vld [vmem:[#allocation5 + $0x9a8] sm:$0xff]
    %v405 = vld [vmem:[#allocation5 + $0x9b0] sm:$0xff]
    %v406 = vld [vmem:[#allocation5 + $0x9b8] sm:$0xff]
    %v407 = vld [vmem:[#allocation5 + $0x9c0] sm:$0xff]
    %v408 = vld [vmem:[#allocation5 + $0x9c8] sm:$0xff]
    %v409 = vld [vmem:[#allocation5 + $0x9d0] sm:$0xff]
    %v410 = vld [vmem:[#allocation5 + $0x9d8] sm:$0xff]
    %v411 = vld [vmem:[#allocation5 + $0x9e0] sm:$0xff]
    %v412 = vld [vmem:[#allocation5 + $0x9e8] sm:$0xff]
    %v413 = vld [vmem:[#allocation5 + $0x9f0] sm:$0xff]
    %v414 = vld [vmem:[#allocation5 + $0x9f8] sm:$0xff]
    %v415 = vld [vmem:[#allocation5 + $0xa00] sm:$0xff]
    %v416 = vld [vmem:[#allocation5 + $0xa08] sm:$0xff]
    %v417 = vld [vmem:[#allocation5 + $0xa10] sm:$0xff]
    %v418 = vld [vmem:[#allocation5 + $0xa18] sm:$0xff]
    %v419 = vld [vmem:[#allocation5 + $0xa20] sm:$0xff]
    %v420 = vld [vmem:[#allocation5 + $0xa28] sm:$0xff]
    %v421 = vld [vmem:[#allocation5 + $0xa30] sm:$0xff]
    %v422 = vld [vmem:[#allocation5 + $0xa38] sm:$0xff]
    %v423 = vld [vmem:[#allocation5 + $0xa40] sm:$0xff]
    %v424 = vld [vmem:[#allocation5 + $0xa48] sm:$0xff]
    %v425 = vld [vmem:[#allocation5 + $0xa50] sm:$0xff]
    %v426 = vld [vmem:[#allocation5 + $0xa58] sm:$0xff]
    %v427 = vld [vmem:[#allocation5 + $0xa60] sm:$0xff]
    %v428 = vld [vmem:[#allocation5 + $0xa68] sm:$0xff]
    %v429 = vld [vmem:[#allocation5 + $0xa70] sm:$0xff]
    %v430 = vld [vmem:[#allocation5 + $0xa78] sm:$0xff]
    %v431 = vld [vmem:[#allocation5 + $0xa80] sm:$0xff]
    %v432 = vld [vmem:[#allocation5 + $0xa88] sm:$0xff]
    %v433 = vld [vmem:[#allocation5 + $0xa90] sm:$0xff]
    %v434 = vld [vmem:[#allocation5 + $0xa98] sm:$0xff]
    %v435 = vld [vmem:[#allocation5 + $0xaa0] sm:$0xff]
    %v436 = vld [vmem:[#allocation5 + $0xaa8] sm:$0xff]
    %v437 = vld [vmem:[#allocation5 + $0xab0] sm:$0xff]
    %v438 = vld [vmem:[#allocation5 + $0xab8] sm:$0xff]
    %v439 = vld [vmem:[#allocation5 + $0xac0] sm:$0xff]
    %v440 = vld [vmem:[#allocation5 + $0xac8] sm:$0xff]
    %v441 = vld [vmem:[#allocation5 + $0xad0] sm:$0xff]
    %v442 = vld [vmem:[#allocation5 + $0xad8] sm:$0xff]
    %v443 = vld [vmem:[#allocation5 + $0xae0] sm:$0xff]
    %v444 = vld [vmem:[#allocation5 + $0xae8] sm:$0xff]
    %v445 = vld [vmem:[#allocation5 + $0xaf0] sm:$0xff]
    %v446 = vld [vmem:[#allocation5 + $0xaf8] sm:$0xff]
    %v447 = vld [vmem:[#allocation5 + $0xb00] sm:$0xff]
    %v448 = vld [vmem:[#allocation5 + $0xb08] sm:$0xff]
    %v449 = vld [vmem:[#allocation5 + $0xb10] sm:$0xff]
    %v450 = vld [vmem:[#allocation5 + $0xb18] sm:$0xff]
    %v451 = vld [vmem:[#allocation5 + $0xb20] sm:$0xff]
    %v452 = vld [vmem:[#allocation5 + $0xb28] sm:$0xff]
    %v453 = vld [vmem:[#allocation5 + $0xb30] sm:$0xff]
    %v454 = vld [vmem:[#allocation5 + $0xb38] sm:$0xff]
    %v455 = vld [vmem:[#allocation5 + $0xb40] sm:$0xff]
    %v456 = vld [vmem:[#allocation5 + $0xb48] sm:$0xff]
    %v457 = vld [vmem:[#allocation5 + $0xb50] sm:$0xff]
    %v458 = vld [vmem:[#allocation5 + $0xb58] sm:$0xff]
    %v459 = vld [vmem:[#allocation5 + $0xb60] sm:$0xff]
    %v460 = vld [vmem:[#allocation5 + $0xb68] sm:$0xff]
    %v461 = vld [vmem:[#allocation5 + $0xb70] sm:$0xff]
    %v462 = vld [vmem:[#allocation5 + $0xb78] sm:$0xff]
    %v463 = vld [vmem:[#allocation5 + $0xb80] sm:$0xff]
    %v464 = vld [vmem:[#allocation5 + $0xb88] sm:$0xff]
    %v465 = vld [vmem:[#allocation5 + $0xb90] sm:$0xff]
    %v466 = vld [vmem:[#allocation5 + $0xb98] sm:$0xff]
    %v467 = vld [vmem:[#allocation5 + $0xba0] sm:$0xff]
    %v468 = vld [vmem:[#allocation5 + $0xba8] sm:$0xff]
    %v469 = vld [vmem:[#allocation5 + $0xbb0] sm:$0xff]
    %v470 = vld [vmem:[#allocation5 + $0xbb8] sm:$0xff]
    %v471 = vld [vmem:[#allocation5 + $0xbc0] sm:$0xff]
    %v472 = vld [vmem:[#allocation5 + $0xbc8] sm:$0xff]
    %v473 = vld [vmem:[#allocation5 + $0xbd0] sm:$0xff]
    %v474 = vld [vmem:[#allocation5 + $0xbd8] sm:$0xff]
    %v475 = vld [vmem:[#allocation5 + $0xbe0] sm:$0xff]
    %v476 = vld [vmem:[#allocation5 + $0xbe8] sm:$0xff]
    %v477 = vld [vmem:[#allocation5 + $0xbf0] sm:$0xff]
    %v478 = vld [vmem:[#allocation5 + $0xbf8] sm:$0xff]
    %v479 = vld [vmem:[#allocation7] sm:$0xf]
    %v481 = vperm.slane %v479, 0
    %v482 = vperm.slane %v479, 1
    %v483 = vperm.slane %v479, 2
    %v484 = vperm.slane %v479, 3
    %490 = vst [vmem:[#allocation1] ss:$9 sm:$0xff] %v93
    %v491 = vld [vmem:[#allocation1] sm:$0xff]
    %v492 = vld [vmem:[#allocation1 + $0x9] sm:$0xff]
    %v493 = vld [vmem:[#allocation1 + $0x12] sm:$0xff]
    %v494 = vld [vmem:[#allocation1 + $0x1b] sm:$0xff]
    %v495 = vld [vmem:[#allocation1 + $0x24] sm:$0xff]
    %v496 = vld [vmem:[#allocation1 + $0x2d] sm:$0xff]
    %v497 = vld [vmem:[#allocation1 + $0x36] sm:$0xff]
    %v498 = vld [vmem:[#allocation1 + $0x3f] sm:$0xff]
    %500 = vst [vmem:[#allocation1] ss:$9 sm:$0xff] %v94
    %v501 = vld [vmem:[#allocation1] sm:$0xff]
    %v502 = vld [vmem:[#allocation1 + $0x9] sm:$0xff]
    %v503 = vld [vmem:[#allocation1 + $0x12] sm:$0xff]
    %v504 = vld [vmem:[#allocation1 + $0x1b] sm:$0xff]
    %v901 = vunpack.c.l.b16 %v95
    %v902 = vunpack.c.h.b16 %v95
    %v903 = vunpack.c.l.b16 %v96
    %v904 = vunpack.c.h.b16 %v96
    %v905 = vunpack.c.l.b16 %v97
    %v906 = vunpack.c.h.b16 %v97
    %v907 = vunpack.c.l.b16 %v98
    %v908 = vunpack.c.h.b16 %v98
    %v909 = vunpack.c.l.b16 %v99
    %v910 = vunpack.c.h.b16 %v99
    %v911 = vunpack.c.l.b16 %v100
    %v912 = vunpack.c.h.b16 %v100
    %v913 = vunpack.c.l.b16 %v101
    %v914 = vunpack.c.h.b16 %v101
    %v915 = vunpack.c.l.b16 %v102
    %v916 = vunpack.c.h.b16 %v102
    %v917 = vunpack.c.l.b16 %v103
    %v918 = vunpack.c.h.b16 %v103
    %v919 = vunpack.c.l.b16 %v104
    %v920 = vunpack.c.h.b16 %v104
    %v921 = vunpack.c.l.b16 %v105
    %v922 = vunpack.c.h.b16 %v105
    %v923 = vunpack.c.l.b16 %v106
    %v924 = vunpack.c.h.b16 %v106
    %v925 = vunpack.c.l.b16 %v107
    %v926 = vunpack.c.h.b16 %v107
    %v927 = vunpack.c.l.b16 %v108
    %v928 = vunpack.c.h.b16 %v108
    %v929 = vunpack.c.l.b16 %v109
    %v930 = vunpack.c.h.b16 %v109
    %v931 = vunpack.c.l.b16 %v110
    %v932 = vunpack.c.h.b16 %v110
    %v933 = vunpack.c.l.b16 %v111
    %v934 = vunpack.c.h.b16 %v111
    %v935 = vunpack.c.l.b16 %v112
    %v936 = vunpack.c.h.b16 %v112
    %v937 = vunpack.c.l.b16 %v113
    %v938 = vunpack.c.h.b16 %v113
    %v939 = vunpack.c.l.b16 %v114
    %v940 = vunpack.c.h.b16 %v114
    %v941 = vunpack.c.l.b16 %v115
    %v942 = vunpack.c.h.b16 %v115
    %v943 = vunpack.c.l.b16 %v116
    %v944 = vunpack.c.h.b16 %v116
    %v945 = vunpack.c.l.b16 %v117
    %v946 = vunpack.c.h.b16 %v117
    %v947 = vunpack.c.l.b16 %v118
    %v948 = vunpack.c.h.b16 %v118
    %v949 = vunpack.c.l.b16 %v119
    %v950 = vunpack.c.h.b16 %v119
    %v951 = vunpack.c.l.b16 %v120
    %v952 = vunpack.c.h.b16 %v120
    %v953 = vunpack.c.l.b16 %v121
    %v954 = vunpack.c.h.b16 %v121
    %v955 = vunpack.c.l.b16 %v122
    %v956 = vunpack.c.h.b16 %v122
    %v957 = vunpack.c.l.b16 %v123
    %v958 = vunpack.c.h.b16 %v123
    %v959 = vunpack.c.l.b16 %v124
    %v960 = vunpack.c.h.b16 %v124
    %v961 = vunpack.c.l.b16 %v125
    %v962 = vunpack.c.h.b16 %v125
    %v963 = vunpack.c.l.b16 %v126
    %v964 = vunpack.c.h.b16 %v126
    %v965 = vunpack.c.l.b16 %v127
    %v966 = vunpack.c.h.b16 %v127
    %v967 = vunpack.c.l.b16 %v128
    %v968 = vunpack.c.h.b16 %v128
    %v969 = vunpack.c.l.b16 %v129
    %v970 = vunpack.c.h.b16 %v129
    %v971 = vunpack.c.l.b16 %v130
    %v972 = vunpack.c.h.b16 %v130
    %v973 = vunpack.c.l.b16 %v131
    %v974 = vunpack.c.h.b16 %v131
    %v975 = vunpack.c.l.b16 %v132
    %v976 = vunpack.c.h.b16 %v132
    %v977 = vunpack.c.l.b16 %v133
    %v978 = vunpack.c.h.b16 %v133
    %v979 = vunpack.c.l.b16 %v134
    %v980 = vunpack.c.h.b16 %v134
    %v981 = vunpack.c.l.b16 %v135
    %v982 = vunpack.c.h.b16 %v135
    %v983 = vunpack.c.l.b16 %v136
    %v984 = vunpack.c.h.b16 %v136
    %v985 = vunpack.c.l.b16 %v137
    %v986 = vunpack.c.h.b16 %v137
    %v987 = vunpack.c.l.b16 %v138
    %v988 = vunpack.c.h.b16 %v138
    %v989 = vunpack.c.l.b16 %v139
    %v990 = vunpack.c.h.b16 %v139
    %v991 = vunpack.c.l.b16 %v140
    %v992 = vunpack.c.h.b16 %v140
    %v993 = vunpack.c.l.b16 %v141
    %v994 = vunpack.c.h.b16 %v141
    %v995 = vunpack.c.l.b16 %v142
    %v996 = vunpack.c.h.b16 %v142
    %v997 = vunpack.c.l.b16 %v143
    %v998 = vunpack.c.h.b16 %v143
    %v999 = vunpack.c.l.b16 %v144
    %v1000 = vunpack.c.h.b16 %v144
    %v1001 = vunpack.c.l.b16 %v145
    %v1002 = vunpack.c.h.b16 %v145
    %v1003 = vunpack.c.l.b16 %v146
    %v1004 = vunpack.c.h.b16 %v146
    %v1005 = vunpack.c.l.b16 %v147
    %v1006 = vunpack.c.h.b16 %v147
    %v1007 = vunpack.c.l.b16 %v148
    %v1008 = vunpack.c.h.b16 %v148
    %v1009 = vunpack.c.l.b16 %v149
    %v1010 = vunpack.c.h.b16 %v149
    %v1011 = vunpack.c.l.b16 %v150
    %v1012 = vunpack.c.h.b16 %v150
    %v1013 = vunpack.c.l.b16 %v151
    %v1014 = vunpack.c.h.b16 %v151
    %v1015 = vunpack.c.l.b16 %v152
    %v1016 = vunpack.c.h.b16 %v152
    %v1017 = vunpack.c.l.b16 %v153
    %v1018 = vunpack.c.h.b16 %v153
    %v1019 = vunpack.c.l.b16 %v154
    %v1020 = vunpack.c.h.b16 %v154
    %v1021 = vunpack.c.l.b16 %v155
    %v1022 = vunpack.c.h.b16 %v155
    %v1023 = vunpack.c.l.b16 %v156
    %v1024 = vunpack.c.h.b16 %v156
    %v1025 = vunpack.c.l.b16 %v157
    %v1026 = vunpack.c.h.b16 %v157
    %v1027 = vunpack.c.l.b16 %v158
    %v1028 = vunpack.c.h.b16 %v158
    %v1029 = vunpack.c.l.b16 %v159
    %v1030 = vunpack.c.h.b16 %v159
    %v1031 = vunpack.c.l.b16 %v160
    %v1032 = vunpack.c.h.b16 %v160
    %v1033 = vunpack.c.l.b16 %v161
    %v1034 = vunpack.c.h.b16 %v161
    %v1035 = vunpack.c.l.b16 %v162
    %v1036 = vunpack.c.h.b16 %v162
    %v1037 = vunpack.c.l.b16 %v163
    %v1038 = vunpack.c.h.b16 %v163
    %v1039 = vunpack.c.l.b16 %v164
    %v1040 = vunpack.c.h.b16 %v164
    %v1041 = vunpack.c.l.b16 %v165
    %v1042 = vunpack.c.h.b16 %v165
    %v1043 = vunpack.c.l.b16 %v166
    %v1044 = vunpack.c.h.b16 %v166
    %v1045 = vunpack.c.l.b16 %v167
    %v1046 = vunpack.c.h.b16 %v167
    %v1047 = vunpack.c.l.b16 %v168
    %v1048 = vunpack.c.h.b16 %v168
    %v1049 = vunpack.c.l.b16 %v169
    %v1050 = vunpack.c.h.b16 %v169
    %v1051 = vunpack.c.l.b16 %v170
    %v1052 = vunpack.c.h.b16 %v170
    %v1053 = vunpack.c.l.b16 %v171
    %v1054 = vunpack.c.h.b16 %v171
    %v1055 = vunpack.c.l.b16 %v172
    %v1056 = vunpack.c.h.b16 %v172
    %v1057 = vunpack.c.l.b16 %v173
    %v1058 = vunpack.c.h.b16 %v173
    %v1059 = vunpack.c.l.b16 %v174
    %v1060 = vunpack.c.h.b16 %v174
    %v1061 = vunpack.c.l.b16 %v175
    %v1062 = vunpack.c.h.b16 %v175
    %v1063 = vunpack.c.l.b16 %v176
    %v1064 = vunpack.c.h.b16 %v176
    %v1065 = vunpack.c.l.b16 %v177
    %v1066 = vunpack.c.h.b16 %v177
    %v1067 = vunpack.c.l.b16 %v178
    %v1068 = vunpack.c.h.b16 %v178
    %v1069 = vunpack.c.l.b16 %v179
    %v1070 = vunpack.c.h.b16 %v179
    %v1071 = vunpack.c.l.b16 %v180
    %v1072 = vunpack.c.h.b16 %v180
    %v1073 = vunpack.c.l.b16 %v181
    %v1074 = vunpack.c.h.b16 %v181
    %v1075 = vunpack.c.l.b16 %v182
    %v1076 = vunpack.c.h.b16 %v182
    %v1077 = vunpack.c.l.b16 %v183
    %v1078 = vunpack.c.h.b16 %v183
    %v1079 = vunpack.c.l.b16 %v184
    %v1080 = vunpack.c.h.b16 %v184
    %v1081 = vunpack.c.l.b16 %v185
    %v1082 = vunpack.c.h.b16 %v185
    %v1083 = vunpack.c.l.b16 %v186
    %v1084 = vunpack.c.h.b16 %v186
    %v1085 = vunpack.c.l.b16 %v187
    %v1086 = vunpack.c.h.b16 %v187
    %v1087 = vunpack.c.l.b16 %v188
    %v1088 = vunpack.c.h.b16 %v188
    %v1089 = vunpack.c.l.b16 %v189
    %v1090 = vunpack.c.h.b16 %v189
    %v1091 = vunpack.c.l.b16 %v190
    %v1092 = vunpack.c.h.b16 %v190
    %v1093 = vunpack.c.l.b16 %v191
    %v1094 = vunpack.c.h.b16 %v191
    %v1095 = vunpack.c.l.b16 %v192
    %v1096 = vunpack.c.h.b16 %v192
    %v1097 = vunpack.c.l.b16 %v193
    %v1098 = vunpack.c.h.b16 %v193
    %v1099 = vunpack.c.l.b16 %v194
    %v1100 = vunpack.c.h.b16 %v194
    %v1101 = vunpack.c.l.b16 %v195
    %v1102 = vunpack.c.h.b16 %v195
    %v1103 = vunpack.c.l.b16 %v196
    %v1104 = vunpack.c.h.b16 %v196
    %v1105 = vunpack.c.l.b16 %v197
    %v1106 = vunpack.c.h.b16 %v197
    %v1107 = vunpack.c.l.b16 %v198
    %v1108 = vunpack.c.h.b16 %v198
    %v1109 = vunpack.c.l.b16 %v199
    %v1110 = vunpack.c.h.b16 %v199
    %v1111 = vunpack.c.l.b16 %v200
    %v1112 = vunpack.c.h.b16 %v200
    %v1113 = vunpack.c.l.b16 %v201
    %v1114 = vunpack.c.h.b16 %v201
    %v1115 = vunpack.c.l.b16 %v202
    %v1116 = vunpack.c.h.b16 %v202
    %v1117 = vunpack.c.l.b16 %v203
    %v1118 = vunpack.c.h.b16 %v203
    %v1119 = vunpack.c.l.b16 %v204
    %v1120 = vunpack.c.h.b16 %v204
    %v1121 = vunpack.c.l.b16 %v205
    %v1122 = vunpack.c.h.b16 %v205
    %v1123 = vunpack.c.l.b16 %v206
    %v1124 = vunpack.c.h.b16 %v206
    %v1125 = vunpack.c.l.b16 %v207
    %v1126 = vunpack.c.h.b16 %v207
    %v1127 = vunpack.c.l.b16 %v208
    %v1128 = vunpack.c.h.b16 %v208
    %v1129 = vunpack.c.l.b16 %v209
    %v1130 = vunpack.c.h.b16 %v209
    %v1131 = vunpack.c.l.b16 %v210
    %v1132 = vunpack.c.h.b16 %v210
    %v1133 = vunpack.c.l.b16 %v211
    %v1134 = vunpack.c.h.b16 %v211
    %v1135 = vunpack.c.l.b16 %v212
    %v1136 = vunpack.c.h.b16 %v212
    %v1137 = vunpack.c.l.b16 %v213
    %v1138 = vunpack.c.h.b16 %v213
    %v1139 = vunpack.c.l.b16 %v214
    %v1140 = vunpack.c.h.b16 %v214
    %v1141 = vunpack.c.l.b16 %v215
    %v1142 = vunpack.c.h.b16 %v215
    %v1143 = vunpack.c.l.b16 %v216
    %v1144 = vunpack.c.h.b16 %v216
    %v1145 = vunpack.c.l.b16 %v217
    %v1146 = vunpack.c.h.b16 %v217
    %v1147 = vunpack.c.l.b16 %v218
    %v1148 = vunpack.c.h.b16 %v218
    %v1149 = vunpack.c.l.b16 %v219
    %v1150 = vunpack.c.h.b16 %v219
    %v1151 = vunpack.c.l.b16 %v220
    %v1152 = vunpack.c.h.b16 %v220
    %v1153 = vunpack.c.l.b16 %v221
    %v1154 = vunpack.c.h.b16 %v221
    %v1155 = vunpack.c.l.b16 %v222
    %v1156 = vunpack.c.h.b16 %v222
    %v1157 = vunpack.c.l.b16 %v223
    %v1158 = vunpack.c.h.b16 %v223
    %v1159 = vunpack.c.l.b16 %v224
    %v1160 = vunpack.c.h.b16 %v224
    %v1161 = vunpack.c.l.b16 %v225
    %v1162 = vunpack.c.h.b16 %v225
    %v1163 = vunpack.c.l.b16 %v226
    %v1164 = vunpack.c.h.b16 %v226
    %v1165 = vunpack.c.l.b16 %v227
    %v1166 = vunpack.c.h.b16 %v227
    %v1167 = vunpack.c.l.b16 %v228
    %v1168 = vunpack.c.h.b16 %v228
    %v1169 = vunpack.c.l.b16 %v229
    %v1170 = vunpack.c.h.b16 %v229
    %v1171 = vunpack.c.l.b16 %v230
    %v1172 = vunpack.c.h.b16 %v230
    %v1173 = vunpack.c.l.b16 %v231
    %v1174 = vunpack.c.h.b16 %v231
    %v1175 = vunpack.c.l.b16 %v232
    %v1176 = vunpack.c.h.b16 %v232
    %v1177 = vunpack.c.l.b16 %v233
    %v1178 = vunpack.c.h.b16 %v233
    %v1179 = vunpack.c.l.b16 %v234
    %v1180 = vunpack.c.h.b16 %v234
    %v1181 = vunpack.c.l.b16 %v235
    %v1182 = vunpack.c.h.b16 %v235
    %v1183 = vunpack.c.l.b16 %v236
    %v1184 = vunpack.c.h.b16 %v236
    %v1185 = vunpack.c.l.b16 %v237
    %v1186 = vunpack.c.h.b16 %v237
    %v1187 = vunpack.c.l.b16 %v238
    %v1188 = vunpack.c.h.b16 %v238
    %v1189 = vunpack.c.l.b16 %v239
    %v1190 = vunpack.c.h.b16 %v239
    %v1191 = vunpack.c.l.b16 %v240
    %v1192 = vunpack.c.h.b16 %v240
    %v1193 = vunpack.c.l.b16 %v241
    %v1194 = vunpack.c.h.b16 %v241
    %v1195 = vunpack.c.l.b16 %v242
    %v1196 = vunpack.c.h.b16 %v242
    %v1197 = vunpack.c.l.b16 %v243
    %v1198 = vunpack.c.h.b16 %v243
    %v1199 = vunpack.c.l.b16 %v244
    %v1200 = vunpack.c.h.b16 %v244
    %v1201 = vunpack.c.l.b16 %v245
    %v1202 = vunpack.c.h.b16 %v245
    %v1203 = vunpack.c.l.b16 %v246
    %v1204 = vunpack.c.h.b16 %v246
    %v1205 = vunpack.c.l.b16 %v247
    %v1206 = vunpack.c.h.b16 %v247
    %v1207 = vunpack.c.l.b16 %v248
    %v1208 = vunpack.c.h.b16 %v248
    %v1209 = vunpack.c.l.b16 %v249
    %v1210 = vunpack.c.h.b16 %v249
    %v1211 = vunpack.c.l.b16 %v250
    %v1212 = vunpack.c.h.b16 %v250
    %v1213 = vunpack.c.l.b16 %v251
    %v1214 = vunpack.c.h.b16 %v251
    %v1215 = vunpack.c.l.b16 %v252
    %v1216 = vunpack.c.h.b16 %v252
    %v1217 = vunpack.c.l.b16 %v253
    %v1218 = vunpack.c.h.b16 %v253
    %v1219 = vunpack.c.l.b16 %v254
    %v1220 = vunpack.c.h.b16 %v254
    %v1221 = vunpack.c.l.b16 %v255
    %v1222 = vunpack.c.h.b16 %v255
    %v1223 = vunpack.c.l.b16 %v256
    %v1224 = vunpack.c.h.b16 %v256
    %v1225 = vunpack.c.l.b16 %v257
    %v1226 = vunpack.c.h.b16 %v257
    %v1227 = vunpack.c.l.b16 %v258
    %v1228 = vunpack.c.h.b16 %v258
    %v1229 = vunpack.c.l.b16 %v259
    %v1230 = vunpack.c.h.b16 %v259
    %v1231 = vunpack.c.l.b16 %v260
    %v1232 = vunpack.c.h.b16 %v260
    %v1233 = vunpack.c.l.b16 %v261
    %v1234 = vunpack.c.h.b16 %v261
    %v1235 = vunpack.c.l.b16 %v262
    %v1236 = vunpack.c.h.b16 %v262
    %v1237 = vunpack.c.l.b16 %v263
    %v1238 = vunpack.c.h.b16 %v263
    %v1239 = vunpack.c.l.b16 %v264
    %v1240 = vunpack.c.h.b16 %v264
    %v1241 = vunpack.c.l.b16 %v265
    %v1242 = vunpack.c.h.b16 %v265
    %v1243 = vunpack.c.l.b16 %v266
    %v1244 = vunpack.c.h.b16 %v266
    %v1245 = vunpack.c.l.b16 %v267
    %v1246 = vunpack.c.h.b16 %v267
    %v1247 = vunpack.c.l.b16 %v268
    %v1248 = vunpack.c.h.b16 %v268
    %v1249 = vunpack.c.l.b16 %v269
    %v1250 = vunpack.c.h.b16 %v269
    %v1251 = vunpack.c.l.b16 %v270
    %v1252 = vunpack.c.h.b16 %v270
    %v1253 = vunpack.c.l.b16 %v271
    %v1254 = vunpack.c.h.b16 %v271
    %v1255 = vunpack.c.l.b16 %v272
    %v1256 = vunpack.c.h.b16 %v272
    %v1257 = vunpack.c.l.b16 %v273
    %v1258 = vunpack.c.h.b16 %v273
    %v1259 = vunpack.c.l.b16 %v274
    %v1260 = vunpack.c.h.b16 %v274
    %v1261 = vunpack.c.l.b16 %v275
    %v1262 = vunpack.c.h.b16 %v275
    %v1263 = vunpack.c.l.b16 %v276
    %v1264 = vunpack.c.h.b16 %v276
    %v1265 = vunpack.c.l.b16 %v277
    %v1266 = vunpack.c.h.b16 %v277
    %v1267 = vunpack.c.l.b16 %v278
    %v1268 = vunpack.c.h.b16 %v278
    %v1269 = vunpack.c.l.b16 %v279
    %v1270 = vunpack.c.h.b16 %v279
    %v1271 = vunpack.c.l.b16 %v280
    %v1272 = vunpack.c.h.b16 %v280
    %v1273 = vunpack.c.l.b16 %v281
    %v1274 = vunpack.c.h.b16 %v281
    %v1275 = vunpack.c.l.b16 %v282
    %v1276 = vunpack.c.h.b16 %v282
    %v1277 = vunpack.c.l.b16 %v283
    %v1278 = vunpack.c.h.b16 %v283
    %v1279 = vunpack.c.l.b16 %v284
    %v1280 = vunpack.c.h.b16 %v284
    %v1281 = vunpack.c.l.b16 %v285
    %v1282 = vunpack.c.h.b16 %v285
    %v1283 = vunpack.c.l.b16 %v286
    %v1284 = vunpack.c.h.b16 %v286
    %v1285 = vunpack.c.l.b16 %v287
    %v1286 = vunpack.c.h.b16 %v287
    %v1287 = vunpack.c.l.b16 %v288
    %v1288 = vunpack.c.h.b16 %v288
    %v1289 = vunpack.c.l.b16 %v289
    %v1290 = vunpack.c.h.b16 %v289
    %v1291 = vunpack.c.l.b16 %v290
    %v1292 = vunpack.c.h.b16 %v290
    %v1293 = vunpack.c.l.b16 %v291
    %v1294 = vunpack.c.h.b16 %v291
    %v1295 = vunpack.c.l.b16 %v292
    %v1296 = vunpack.c.h.b16 %v292
    %v1297 = vunpack.c.l.b16 %v293
    %v1298 = vunpack.c.h.b16 %v293
    %v1299 = vunpack.c.l.b16 %v294
    %v1300 = vunpack.c.h.b16 %v294
    %v1301 = vunpack.c.l.b16 %v295
    %v1302 = vunpack.c.h.b16 %v295
    %v1303 = vunpack.c.l.b16 %v296
    %v1304 = vunpack.c.h.b16 %v296
    %v1305 = vunpack.c.l.b16 %v297
    %v1306 = vunpack.c.h.b16 %v297
    %v1307 = vunpack.c.l.b16 %v298
    %v1308 = vunpack.c.h.b16 %v298
    %v1309 = vunpack.c.l.b16 %v299
    %v1310 = vunpack.c.h.b16 %v299
    %v1311 = vunpack.c.l.b16 %v300
    %v1312 = vunpack.c.h.b16 %v300
    %v1313 = vunpack.c.l.b16 %v301
    %v1314 = vunpack.c.h.b16 %v301
    %v1315 = vunpack.c.l.b16 %v302
    %v1316 = vunpack.c.h.b16 %v302
    %v1317 = vunpack.c.l.b16 %v303
    %v1318 = vunpack.c.h.b16 %v303
    %v1319 = vunpack.c.l.b16 %v304
    %v1320 = vunpack.c.h.b16 %v304
    %v1321 = vunpack.c.l.b16 %v305
    %v1322 = vunpack.c.h.b16 %v305
    %v1323 = vunpack.c.l.b16 %v306
    %v1324 = vunpack.c.h.b16 %v306
    %v1325 = vunpack.c.l.b16 %v307
    %v1326 = vunpack.c.h.b16 %v307
    %v1327 = vunpack.c.l.b16 %v308
    %v1328 = vunpack.c.h.b16 %v308
    %v1329 = vunpack.c.l.b16 %v309
    %v1330 = vunpack.c.h.b16 %v309
    %v1331 = vunpack.c.l.b16 %v310
    %v1332 = vunpack.c.h.b16 %v310
    %v1333 = vunpack.c.l.b16 %v311
    %v1334 = vunpack.c.h.b16 %v311
    %v1335 = vunpack.c.l.b16 %v312
    %v1336 = vunpack.c.h.b16 %v312
    %v1337 = vunpack.c.l.b16 %v313
    %v1338 = vunpack.c.h.b16 %v313
    %v1339 = vunpack.c.l.b16 %v314
    %v1340 = vunpack.c.h.b16 %v314
    %v1341 = vunpack.c.l.b16 %v315
    %v1342 = vunpack.c.h.b16 %v315
    %v1343 = vunpack.c.l.b16 %v316
    %v1344 = vunpack.c.h.b16 %v316
    %v1345 = vunpack.c.l.b16 %v317
    %v1346 = vunpack.c.h.b16 %v317
    %v1347 = vunpack.c.l.b16 %v318
    %v1348 = vunpack.c.h.b16 %v318
    %v1349 = vunpack.c.l.b16 %v319
    %v1350 = vunpack.c.h.b16 %v319
    %v1351 = vunpack.c.l.b16 %v320
    %v1352 = vunpack.c.h.b16 %v320
    %v1353 = vunpack.c.l.b16 %v321
    %v1354 = vunpack.c.h.b16 %v321
    %v1355 = vunpack.c.l.b16 %v322
    %v1356 = vunpack.c.h.b16 %v322
    %v1357 = vunpack.c.l.b16 %v323
    %v1358 = vunpack.c.h.b16 %v323
    %v1359 = vunpack.c.l.b16 %v324
    %v1360 = vunpack.c.h.b16 %v324
    %v1361 = vunpack.c.l.b16 %v325
    %v1362 = vunpack.c.h.b16 %v325
    %v1363 = vunpack.c.l.b16 %v326
    %v1364 = vunpack.c.h.b16 %v326
    %v1365 = vunpack.c.l.b16 %v327
    %v1366 = vunpack.c.h.b16 %v327
    %v1367 = vunpack.c.l.b16 %v328
    %v1368 = vunpack.c.h.b16 %v328
    %v1369 = vunpack.c.l.b16 %v329
    %v1370 = vunpack.c.h.b16 %v329
    %v1371 = vunpack.c.l.b16 %v330
    %v1372 = vunpack.c.h.b16 %v330
    %v1373 = vunpack.c.l.b16 %v331
    %v1374 = vunpack.c.h.b16 %v331
    %v1375 = vunpack.c.l.b16 %v332
    %v1376 = vunpack.c.h.b16 %v332
    %v1377 = vunpack.c.l.b16 %v333
    %v1378 = vunpack.c.h.b16 %v333
    %v1379 = vunpack.c.l.b16 %v334
    %v1380 = vunpack.c.h.b16 %v334
    %v1381 = vunpack.c.l.b16 %v335
    %v1382 = vunpack.c.h.b16 %v335
    %v1383 = vunpack.c.l.b16 %v336
    %v1384 = vunpack.c.h.b16 %v336
    %v1385 = vunpack.c.l.b16 %v337
    %v1386 = vunpack.c.h.b16 %v337
    %v1387 = vunpack.c.l.b16 %v338
    %v1388 = vunpack.c.h.b16 %v338
    %v1389 = vunpack.c.l.b16 %v339
    %v1390 = vunpack.c.h.b16 %v339
    %v1391 = vunpack.c.l.b16 %v340
    %v1392 = vunpack.c.h.b16 %v340
    %v1393 = vunpack.c.l.b16 %v341
    %v1394 = vunpack.c.h.b16 %v341
    %v1395 = vunpack.c.l.b16 %v342
    %v1396 = vunpack.c.h.b16 %v342
    %v1397 = vunpack.c.l.b16 %v343
    %v1398 = vunpack.c.h.b16 %v343
    %v1399 = vunpack.c.l.b16 %v344
    %v1400 = vunpack.c.h.b16 %v344
    %v1401 = vunpack.c.l.b16 %v345
    %v1402 = vunpack.c.h.b16 %v345
    %v1403 = vunpack.c.l.b16 %v346
    %v1404 = vunpack.c.h.b16 %v346
    %v1405 = vunpack.c.l.b16 %v347
    %v1406 = vunpack.c.h.b16 %v347
    %v1407 = vunpack.c.l.b16 %v348
    %v1408 = vunpack.c.h.b16 %v348
    %v1409 = vunpack.c.l.b16 %v349
    %v1410 = vunpack.c.h.b16 %v349
    %v1411 = vunpack.c.l.b16 %v350
    %v1412 = vunpack.c.h.b16 %v350
    %v1413 = vunpack.c.l.b16 %v351
    %v1414 = vunpack.c.h.b16 %v351
    %v1415 = vunpack.c.l.b16 %v352
    %v1416 = vunpack.c.h.b16 %v352
    %v1417 = vunpack.c.l.b16 %v353
    %v1418 = vunpack.c.h.b16 %v353
    %v1419 = vunpack.c.l.b16 %v354
    %v1420 = vunpack.c.h.b16 %v354
    %v1421 = vunpack.c.l.b16 %v355
    %v1422 = vunpack.c.h.b16 %v355
    %v1423 = vunpack.c.l.b16 %v356
    %v1424 = vunpack.c.h.b16 %v356
    %v1425 = vunpack.c.l.b16 %v357
    %v1426 = vunpack.c.h.b16 %v357
    %v1427 = vunpack.c.l.b16 %v358
    %v1428 = vunpack.c.h.b16 %v358
    %v1429 = vunpack.c.l.b16 %v359
    %v1430 = vunpack.c.h.b16 %v359
    %v1431 = vunpack.c.l.b16 %v360
    %v1432 = vunpack.c.h.b16 %v360
    %v1433 = vunpack.c.l.b16 %v361
    %v1434 = vunpack.c.h.b16 %v361
    %v1435 = vunpack.c.l.b16 %v362
    %v1436 = vunpack.c.h.b16 %v362
    %v1437 = vunpack.c.l.b16 %v363
    %v1438 = vunpack.c.h.b16 %v363
    %v1439 = vunpack.c.l.b16 %v364
    %v1440 = vunpack.c.h.b16 %v364
    %v1441 = vunpack.c.l.b16 %v365
    %v1442 = vunpack.c.h.b16 %v365
    %v1443 = vunpack.c.l.b16 %v366
    %v1444 = vunpack.c.h.b16 %v366
    %v1445 = vunpack.c.l.b16 %v367
    %v1446 = vunpack.c.h.b16 %v367
    %v1447 = vunpack.c.l.b16 %v368
    %v1448 = vunpack.c.h.b16 %v368
    %v1449 = vunpack.c.l.b16 %v369
    %v1450 = vunpack.c.h.b16 %v369
    %v1451 = vunpack.c.l.b16 %v370
    %v1452 = vunpack.c.h.b16 %v370
    %v1453 = vunpack.c.l.b16 %v371
    %v1454 = vunpack.c.h.b16 %v371
    %v1455 = vunpack.c.l.b16 %v372
    %v1456 = vunpack.c.h.b16 %v372
    %v1457 = vunpack.c.l.b16 %v373
    %v1458 = vunpack.c.h.b16 %v373
    %v1459 = vunpack.c.l.b16 %v374
    %v1460 = vunpack.c.h.b16 %v374
    %v1461 = vunpack.c.l.b16 %v375
    %v1462 = vunpack.c.h.b16 %v375
    %v1463 = vunpack.c.l.b16 %v376
    %v1464 = vunpack.c.h.b16 %v376
    %v1465 = vunpack.c.l.b16 %v377
    %v1466 = vunpack.c.h.b16 %v377
    %v1467 = vunpack.c.l.b16 %v378
    %v1468 = vunpack.c.h.b16 %v378
    %v1469 = vunpack.c.l.b16 %v379
    %v1470 = vunpack.c.h.b16 %v379
    %v1471 = vunpack.c.l.b16 %v380
    %v1472 = vunpack.c.h.b16 %v380
    %v1473 = vunpack.c.l.b16 %v381
    %v1474 = vunpack.c.h.b16 %v381
    %v1475 = vunpack.c.l.b16 %v382
    %v1476 = vunpack.c.h.b16 %v382
    %v1477 = vunpack.c.l.b16 %v383
    %v1478 = vunpack.c.h.b16 %v383
    %v1479 = vunpack.c.l.b16 %v384
    %v1480 = vunpack.c.h.b16 %v384
    %v1481 = vunpack.c.l.b16 %v385
    %v1482 = vunpack.c.h.b16 %v385
    %v1483 = vunpack.c.l.b16 %v386
    %v1484 = vunpack.c.h.b16 %v386
    %v1485 = vunpack.c.l.b16 %v387
    %v1486 = vunpack.c.h.b16 %v387
    %v1487 = vunpack.c.l.b16 %v388
    %v1488 = vunpack.c.h.b16 %v388
    %v1489 = vunpack.c.l.b16 %v389
    %v1490 = vunpack.c.h.b16 %v389
    %v1491 = vunpack.c.l.b16 %v390
    %v1492 = vunpack.c.h.b16 %v390
    %v1493 = vunpack.c.l.b16 %v391
    %v1494 = vunpack.c.h.b16 %v391
    %v1495 = vunpack.c.l.b16 %v392
    %v1496 = vunpack.c.h.b16 %v392
    %v1497 = vunpack.c.l.b16 %v393
    %v1498 = vunpack.c.h.b16 %v393
    %v1499 = vunpack.c.l.b16 %v394
    %v1500 = vunpack.c.h.b16 %v394
    %v1501 = vunpack.c.l.b16 %v395
    %v1502 = vunpack.c.h.b16 %v395
    %v1503 = vunpack.c.l.b16 %v396
    %v1504 = vunpack.c.h.b16 %v396
    %v1505 = vunpack.c.l.b16 %v397
    %v1506 = vunpack.c.h.b16 %v397
    %v1507 = vunpack.c.l.b16 %v398
    %v1508 = vunpack.c.h.b16 %v398
    %v1509 = vunpack.c.l.b16 %v399
    %v1510 = vunpack.c.h.b16 %v399
    %v1511 = vunpack.c.l.b16 %v400
    %v1512 = vunpack.c.h.b16 %v400
    %v1513 = vunpack.c.l.b16 %v401
    %v1514 = vunpack.c.h.b16 %v401
    %v1515 = vunpack.c.l.b16 %v402
    %v1516 = vunpack.c.h.b16 %v402
    %v1517 = vunpack.c.l.b16 %v403
    %v1518 = vunpack.c.h.b16 %v403
    %v1519 = vunpack.c.l.b16 %v404
    %v1520 = vunpack.c.h.b16 %v404
    %v1521 = vunpack.c.l.b16 %v405
    %v1522 = vunpack.c.h.b16 %v405
    %v1523 = vunpack.c.l.b16 %v406
    %v1524 = vunpack.c.h.b16 %v406
    %v1525 = vunpack.c.l.b16 %v407
    %v1526 = vunpack.c.h.b16 %v407
    %v1527 = vunpack.c.l.b16 %v408
    %v1528 = vunpack.c.h.b16 %v408
    %v1529 = vunpack.c.l.b16 %v409
    %v1530 = vunpack.c.h.b16 %v409
    %v1531 = vunpack.c.l.b16 %v410
    %v1532 = vunpack.c.h.b16 %v410
    %v1533 = vunpack.c.l.b16 %v411
    %v1534 = vunpack.c.h.b16 %v411
    %v1535 = vunpack.c.l.b16 %v412
    %v1536 = vunpack.c.h.b16 %v412
    %v1537 = vunpack.c.l.b16 %v413
    %v1538 = vunpack.c.h.b16 %v413
    %v1539 = vunpack.c.l.b16 %v414
    %v1540 = vunpack.c.h.b16 %v414
    %v1541 = vunpack.c.l.b16 %v415
    %v1542 = vunpack.c.h.b16 %v415
    %v1543 = vunpack.c.l.b16 %v416
    %v1544 = vunpack.c.h.b16 %v416
    %v1545 = vunpack.c.l.b16 %v417
    %v1546 = vunpack.c.h.b16 %v417
    %v1547 = vunpack.c.l.b16 %v418
    %v1548 = vunpack.c.h.b16 %v418
    %v1549 = vunpack.c.l.b16 %v419
    %v1550 = vunpack.c.h.b16 %v419
    %v1551 = vunpack.c.l.b16 %v420
    %v1552 = vunpack.c.h.b16 %v420
    %v1553 = vunpack.c.l.b16 %v421
    %v1554 = vunpack.c.h.b16 %v421
    %v1555 = vunpack.c.l.b16 %v422
    %v1556 = vunpack.c.h.b16 %v422
    %v1557 = vunpack.c.l.b16 %v423
    %v1558 = vunpack.c.h.b16 %v423
    %v1559 = vunpack.c.l.b16 %v424
    %v1560 = vunpack.c.h.b16 %v424
    %v1561 = vunpack.c.l.b16 %v425
    %v1562 = vunpack.c.h.b16 %v425
    %v1563 = vunpack.c.l.b16 %v426
    %v1564 = vunpack.c.h.b16 %v426
    %v1565 = vunpack.c.l.b16 %v427
    %v1566 = vunpack.c.h.b16 %v427
    %v1567 = vunpack.c.l.b16 %v428
    %v1568 = vunpack.c.h.b16 %v428
    %v1569 = vunpack.c.l.b16 %v429
    %v1570 = vunpack.c.h.b16 %v429
    %v1571 = vunpack.c.l.b16 %v430
    %v1572 = vunpack.c.h.b16 %v430
    %v1573 = vunpack.c.l.b16 %v431
    %v1574 = vunpack.c.h.b16 %v431
    %v1575 = vunpack.c.l.b16 %v432
    %v1576 = vunpack.c.h.b16 %v432
    %v1577 = vunpack.c.l.b16 %v433
    %v1578 = vunpack.c.h.b16 %v433
    %v1579 = vunpack.c.l.b16 %v434
    %v1580 = vunpack.c.h.b16 %v434
    %v1581 = vunpack.c.l.b16 %v435
    %v1582 = vunpack.c.h.b16 %v435
    %v1583 = vunpack.c.l.b16 %v436
    %v1584 = vunpack.c.h.b16 %v436
    %v1585 = vunpack.c.l.b16 %v437
    %v1586 = vunpack.c.h.b16 %v437
    %v1587 = vunpack.c.l.b16 %v438
    %v1588 = vunpack.c.h.b16 %v438
    %v1589 = vunpack.c.l.b16 %v439
    %v1590 = vunpack.c.h.b16 %v439
    %v1591 = vunpack.c.l.b16 %v440
    %v1592 = vunpack.c.h.b16 %v440
    %v1593 = vunpack.c.l.b16 %v441
    %v1594 = vunpack.c.h.b16 %v441
    %v1595 = vunpack.c.l.b16 %v442
    %v1596 = vunpack.c.h.b16 %v442
    %v1597 = vunpack.c.l.b16 %v443
    %v1598 = vunpack.c.h.b16 %v443
    %v1599 = vunpack.c.l.b16 %v444
    %v1600 = vunpack.c.h.b16 %v444
    %v1601 = vunpack.c.l.b16 %v445
    %v1602 = vunpack.c.h.b16 %v445
    %v1603 = vunpack.c.l.b16 %v446
    %v1604 = vunpack.c.h.b16 %v446
    %v1605 = vunpack.c.l.b16 %v447
    %v1606 = vunpack.c.h.b16 %v447
    %v1607 = vunpack.c.l.b16 %v448
    %v1608 = vunpack.c.h.b16 %v448
    %v1609 = vunpack.c.l.b16 %v449
    %v1610 = vunpack.c.h.b16 %v449
    %v1611 = vunpack.c.l.b16 %v450
    %v1612 = vunpack.c.h.b16 %v450
    %v1613 = vunpack.c.l.b16 %v451
    %v1614 = vunpack.c.h.b16 %v451
    %v1615 = vunpack.c.l.b16 %v452
    %v1616 = vunpack.c.h.b16 %v452
    %v1617 = vunpack.c.l.b16 %v453
    %v1618 = vunpack.c.h.b16 %v453
    %v1619 = vunpack.c.l.b16 %v454
    %v1620 = vunpack.c.h.b16 %v454
    %v1621 = vunpack.c.l.b16 %v455
    %v1622 = vunpack.c.h.b16 %v455
    %v1623 = vunpack.c.l.b16 %v456
    %v1624 = vunpack.c.h.b16 %v456
    %v1625 = vunpack.c.l.b16 %v457
    %v1626 = vunpack.c.h.b16 %v457
    %v1627 = vunpack.c.l.b16 %v458
    %v1628 = vunpack.c.h.b16 %v458
    %v1629 = vunpack.c.l.b16 %v459
    %v1630 = vunpack.c.h.b16 %v459
    %v1631 = vunpack.c.l.b16 %v460
    %v1632 = vunpack.c.h.b16 %v460
    %v1633 = vunpack.c.l.b16 %v461
    %v1634 = vunpack.c.h.b16 %v461
    %v1635 = vunpack.c.l.b16 %v462
    %v1636 = vunpack.c.h.b16 %v462
    %v1637 = vunpack.c.l.b16 %v463
    %v1638 = vunpack.c.h.b16 %v463
    %v1639 = vunpack.c.l.b16 %v464
    %v1640 = vunpack.c.h.b16 %v464
    %v1641 = vunpack.c.l.b16 %v465
    %v1642 = vunpack.c.h.b16 %v465
    %v1643 = vunpack.c.l.b16 %v466
    %v1644 = vunpack.c.h.b16 %v466
    %v1645 = vunpack.c.l.b16 %v467
    %v1646 = vunpack.c.h.b16 %v467
    %v1647 = vunpack.c.l.b16 %v468
    %v1648 = vunpack.c.h.b16 %v468
    %v1649 = vunpack.c.l.b16 %v469
    %v1650 = vunpack.c.h.b16 %v469
    %v1651 = vunpack.c.l.b16 %v470
    %v1652 = vunpack.c.h.b16 %v470
    %v1653 = vunpack.c.l.b16 %v471
    %v1654 = vunpack.c.h.b16 %v471
    %v1655 = vunpack.c.l.b16 %v472
    %v1656 = vunpack.c.h.b16 %v472
    %v1657 = vunpack.c.l.b16 %v473
    %v1658 = vunpack.c.h.b16 %v473
    %v1659 = vunpack.c.l.b16 %v474
    %v1660 = vunpack.c.h.b16 %v474
    %v1661 = vunpack.c.l.b16 %v475
    %v1662 = vunpack.c.h.b16 %v475
    %v1663 = vunpack.c.l.b16 %v476
    %v1664 = vunpack.c.h.b16 %v476
    %v1665 = vunpack.c.l.b16 %v477
    %v1666 = vunpack.c.h.b16 %v477
    %v1667 = vunpack.c.l.b16 %v478
    %v1668 = vunpack.c.h.b16 %v478
    %v1669 = vpack.c.b16 %v905, %v901
    %v1670 = vpack.c.b16 %v906, %v902
    %v1671 = vpack.c.b16 %v907, %v903
    %v1672 = vpack.c.b16 %v908, %v904
    %v1673 = vpack.c.b16 %v913, %v909
    %v1674 = vpack.c.b16 %v914, %v910
    %v1675 = vpack.c.b16 %v915, %v911
    %v1676 = vpack.c.b16 %v916, %v912
    %v1677 = vpack.c.b16 %v921, %v917
    %v1678 = vpack.c.b16 %v922, %v918
    %v1679 = vpack.c.b16 %v923, %v919
    %v1680 = vpack.c.b16 %v924, %v920
    %v1681 = vpack.c.b16 %v929, %v925
    %v1682 = vpack.c.b16 %v930, %v926
    %v1683 = vpack.c.b16 %v931, %v927
    %v1684 = vpack.c.b16 %v932, %v928
    %v1685 = vpack.c.b16 %v937, %v933
    %v1686 = vpack.c.b16 %v938, %v934
    %v1687 = vpack.c.b16 %v939, %v935
    %v1688 = vpack.c.b16 %v940, %v936
    %v1689 = vpack.c.b16 %v945, %v941
    %v1690 = vpack.c.b16 %v946, %v942
    %v1691 = vpack.c.b16 %v947, %v943
    %v1692 = vpack.c.b16 %v948, %v944
    %v1693 = vpack.c.b16 %v953, %v949
    %v1694 = vpack.c.b16 %v954, %v950
    %v1695 = vpack.c.b16 %v955, %v951
    %v1696 = vpack.c.b16 %v956, %v952
    %v1697 = vpack.c.b16 %v961, %v957
    %v1698 = vpack.c.b16 %v962, %v958
    %v1699 = vpack.c.b16 %v963, %v959
    %v1700 = vpack.c.b16 %v964, %v960
    %v1701 = vpack.c.b16 %v969, %v965
    %v1702 = vpack.c.b16 %v970, %v966
    %v1703 = vpack.c.b16 %v971, %v967
    %v1704 = vpack.c.b16 %v972, %v968
    %v1705 = vpack.c.b16 %v977, %v973
    %v1706 = vpack.c.b16 %v978, %v974
    %v1707 = vpack.c.b16 %v979, %v975
    %v1708 = vpack.c.b16 %v980, %v976
    %v1709 = vpack.c.b16 %v985, %v981
    %v1710 = vpack.c.b16 %v986, %v982
    %v1711 = vpack.c.b16 %v987, %v983
    %v1712 = vpack.c.b16 %v988, %v984
    %v1713 = vpack.c.b16 %v993, %v989
    %v1714 = vpack.c.b16 %v994, %v990
    %v1715 = vpack.c.b16 %v995, %v991
    %v1716 = vpack.c.b16 %v996, %v992
    %v1717 = vpack.c.b16 %v1001, %v997
    %v1718 = vpack.c.b16 %v1002, %v998
    %v1719 = vpack.c.b16 %v1003, %v999
    %v1720 = vpack.c.b16 %v1004, %v1000
    %v1721 = vpack.c.b16 %v1009, %v1005
    %v1722 = vpack.c.b16 %v1010, %v1006
    %v1723 = vpack.c.b16 %v1011, %v1007
    %v1724 = vpack.c.b16 %v1012, %v1008
    %v1725 = vpack.c.b16 %v1017, %v1013
    %v1726 = vpack.c.b16 %v1018, %v1014
    %v1727 = vpack.c.b16 %v1019, %v1015
    %v1728 = vpack.c.b16 %v1020, %v1016
    %v1729 = vpack.c.b16 %v1025, %v1021
    %v1730 = vpack.c.b16 %v1026, %v1022
    %v1731 = vpack.c.b16 %v1027, %v1023
    %v1732 = vpack.c.b16 %v1028, %v1024
    %v1733 = vpack.c.b16 %v1033, %v1029
    %v1734 = vpack.c.b16 %v1034, %v1030
    %v1735 = vpack.c.b16 %v1035, %v1031
    %v1736 = vpack.c.b16 %v1036, %v1032
    %v1737 = vpack.c.b16 %v1041, %v1037
    %v1738 = vpack.c.b16 %v1042, %v1038
    %v1739 = vpack.c.b16 %v1043, %v1039
    %v1740 = vpack.c.b16 %v1044, %v1040
    %v1741 = vpack.c.b16 %v1049, %v1045
    %v1742 = vpack.c.b16 %v1050, %v1046
    %v1743 = vpack.c.b16 %v1051, %v1047
    %v1744 = vpack.c.b16 %v1052, %v1048
    %v1745 = vpack.c.b16 %v1057, %v1053
    %v1746 = vpack.c.b16 %v1058, %v1054
    %v1747 = vpack.c.b16 %v1059, %v1055
    %v1748 = vpack.c.b16 %v1060, %v1056
    %v1749 = vpack.c.b16 %v1065, %v1061
    %v1750 = vpack.c.b16 %v1066, %v1062
    %v1751 = vpack.c.b16 %v1067, %v1063
    %v1752 = vpack.c.b16 %v1068, %v1064
    %v1753 = vpack.c.b16 %v1073, %v1069
    %v1754 = vpack.c.b16 %v1074, %v1070
    %v1755 = vpack.c.b16 %v1075, %v1071
    %v1756 = vpack.c.b16 %v1076, %v1072
    %v1757 = vpack.c.b16 %v1081, %v1077
    %v1758 = vpack.c.b16 %v1082, %v1078
    %v1759 = vpack.c.b16 %v1083, %v1079
    %v1760 = vpack.c.b16 %v1084, %v1080
    %v1761 = vpack.c.b16 %v1089, %v1085
    %v1762 = vpack.c.b16 %v1090, %v1086
    %v1763 = vpack.c.b16 %v1091, %v1087
    %v1764 = vpack.c.b16 %v1092, %v1088
    %v1765 = vpack.c.b16 %v1097, %v1093
    %v1766 = vpack.c.b16 %v1098, %v1094
    %v1767 = vpack.c.b16 %v1099, %v1095
    %v1768 = vpack.c.b16 %v1100, %v1096
    %v1769 = vpack.c.b16 %v1105, %v1101
    %v1770 = vpack.c.b16 %v1106, %v1102
    %v1771 = vpack.c.b16 %v1107, %v1103
    %v1772 = vpack.c.b16 %v1108, %v1104
    %v1773 = vpack.c.b16 %v1113, %v1109
    %v1774 = vpack.c.b16 %v1114, %v1110
    %v1775 = vpack.c.b16 %v1115, %v1111
    %v1776 = vpack.c.b16 %v1116, %v1112
    %v1777 = vpack.c.b16 %v1121, %v1117
    %v1778 = vpack.c.b16 %v1122, %v1118
    %v1779 = vpack.c.b16 %v1123, %v1119
    %v1780 = vpack.c.b16 %v1124, %v1120
    %v1781 = vpack.c.b16 %v1129, %v1125
    %v1782 = vpack.c.b16 %v1130, %v1126
    %v1783 = vpack.c.b16 %v1131, %v1127
    %v1784 = vpack.c.b16 %v1132, %v1128
    %v1785 = vpack.c.b16 %v1137, %v1133
    %v1786 = vpack.c.b16 %v1138, %v1134
    %v1787 = vpack.c.b16 %v1139, %v1135
    %v1788 = vpack.c.b16 %v1140, %v1136
    %v1789 = vpack.c.b16 %v1145, %v1141
    %v1790 = vpack.c.b16 %v1146, %v1142
    %v1791 = vpack.c.b16 %v1147, %v1143
    %v1792 = vpack.c.b16 %v1148, %v1144
    %v1793 = vpack.c.b16 %v1153, %v1149
    %v1794 = vpack.c.b16 %v1154, %v1150
    %v1795 = vpack.c.b16 %v1155, %v1151
    %v1796 = vpack.c.b16 %v1156, %v1152
    %v1797 = vpack.c.b16 %v1161, %v1157
    %v1798 = vpack.c.b16 %v1162, %v1158
    %v1799 = vpack.c.b16 %v1163, %v1159
    %v1800 = vpack.c.b16 %v1164, %v1160
    %v1801 = vpack.c.b16 %v1169, %v1165
    %v1802 = vpack.c.b16 %v1170, %v1166
    %v1803 = vpack.c.b16 %v1171, %v1167
    %v1804 = vpack.c.b16 %v1172, %v1168
    %v1805 = vpack.c.b16 %v1177, %v1173
    %v1806 = vpack.c.b16 %v1178, %v1174
    %v1807 = vpack.c.b16 %v1179, %v1175
    %v1808 = vpack.c.b16 %v1180, %v1176
    %v1809 = vpack.c.b16 %v1185, %v1181
    %v1810 = vpack.c.b16 %v1186, %v1182
    %v1811 = vpack.c.b16 %v1187, %v1183
    %v1812 = vpack.c.b16 %v1188, %v1184
    %v1813 = vpack.c.b16 %v1193, %v1189
    %v1814 = vpack.c.b16 %v1194, %v1190
    %v1815 = vpack.c.b16 %v1195, %v1191
    %v1816 = vpack.c.b16 %v1196, %v1192
    %v1817 = vpack.c.b16 %v1201, %v1197
    %v1818 = vpack.c.b16 %v1202, %v1198
    %v1819 = vpack.c.b16 %v1203, %v1199
    %v1820 = vpack.c.b16 %v1204, %v1200
    %v1821 = vpack.c.b16 %v1209, %v1205
    %v1822 = vpack.c.b16 %v1210, %v1206
    %v1823 = vpack.c.b16 %v1211, %v1207
    %v1824 = vpack.c.b16 %v1212, %v1208
    %v1825 = vpack.c.b16 %v1217, %v1213
    %v1826 = vpack.c.b16 %v1218, %v1214
    %v1827 = vpack.c.b16 %v1219, %v1215
    %v1828 = vpack.c.b16 %v1220, %v1216
    %v1829 = vpack.c.b16 %v1225, %v1221
    %v1830 = vpack.c.b16 %v1226, %v1222
    %v1831 = vpack.c.b16 %v1227, %v1223
    %v1832 = vpack.c.b16 %v1228, %v1224
    %v1833 = vpack.c.b16 %v1233, %v1229
    %v1834 = vpack.c.b16 %v1234, %v1230
    %v1835 = vpack.c.b16 %v1235, %v1231
    %v1836 = vpack.c.b16 %v1236, %v1232
    %v1837 = vpack.c.b16 %v1241, %v1237
    %v1838 = vpack.c.b16 %v1242, %v1238
    %v1839 = vpack.c.b16 %v1243, %v1239
    %v1840 = vpack.c.b16 %v1244, %v1240
    %v1841 = vpack.c.b16 %v1249, %v1245
    %v1842 = vpack.c.b16 %v1250, %v1246
    %v1843 = vpack.c.b16 %v1251, %v1247
    %v1844 = vpack.c.b16 %v1252, %v1248
    %v1845 = vpack.c.b16 %v1257, %v1253
    %v1846 = vpack.c.b16 %v1258, %v1254
    %v1847 = vpack.c.b16 %v1259, %v1255
    %v1848 = vpack.c.b16 %v1260, %v1256
    %v1849 = vpack.c.b16 %v1265, %v1261
    %v1850 = vpack.c.b16 %v1266, %v1262
    %v1851 = vpack.c.b16 %v1267, %v1263
    %v1852 = vpack.c.b16 %v1268, %v1264
    %v1853 = vpack.c.b16 %v1273, %v1269
    %v1854 = vpack.c.b16 %v1274, %v1270
    %v1855 = vpack.c.b16 %v1275, %v1271
    %v1856 = vpack.c.b16 %v1276, %v1272
    %v1857 = vpack.c.b16 %v1281, %v1277
    %v1858 = vpack.c.b16 %v1282, %v1278
    %v1859 = vpack.c.b16 %v1283, %v1279
    %v1860 = vpack.c.b16 %v1284, %v1280
    %v1861 = vpack.c.b16 %v1289, %v1285
    %v1862 = vpack.c.b16 %v1290, %v1286
    %v1863 = vpack.c.b16 %v1291, %v1287
    %v1864 = vpack.c.b16 %v1292, %v1288
    %v1865 = vpack.c.b16 %v1297, %v1293
    %v1866 = vpack.c.b16 %v1298, %v1294
    %v1867 = vpack.c.b16 %v1299, %v1295
    %v1868 = vpack.c.b16 %v1300, %v1296
    %v1869 = vpack.c.b16 %v1305, %v1301
    %v1870 = vpack.c.b16 %v1306, %v1302
    %v1871 = vpack.c.b16 %v1307, %v1303
    %v1872 = vpack.c.b16 %v1308, %v1304
    %v1873 = vpack.c.b16 %v1313, %v1309
    %v1874 = vpack.c.b16 %v1314, %v1310
    %v1875 = vpack.c.b16 %v1315, %v1311
    %v1876 = vpack.c.b16 %v1316, %v1312
    %v1877 = vpack.c.b16 %v1321, %v1317
    %v1878 = vpack.c.b16 %v1322, %v1318
    %v1879 = vpack.c.b16 %v1323, %v1319
    %v1880 = vpack.c.b16 %v1324, %v1320
    %v1881 = vpack.c.b16 %v1329, %v1325
    %v1882 = vpack.c.b16 %v1330, %v1326
    %v1883 = vpack.c.b16 %v1331, %v1327
    %v1884 = vpack.c.b16 %v1332, %v1328
    %v1885 = vpack.c.b16 %v1337, %v1333
    %v1886 = vpack.c.b16 %v1338, %v1334
    %v1887 = vpack.c.b16 %v1339, %v1335
    %v1888 = vpack.c.b16 %v1340, %v1336
    %v1889 = vpack.c.b16 %v1345, %v1341
    %v1890 = vpack.c.b16 %v1346, %v1342
    %v1891 = vpack.c.b16 %v1347, %v1343
    %v1892 = vpack.c.b16 %v1348, %v1344
    %v1893 = vpack.c.b16 %v1353, %v1349
    %v1894 = vpack.c.b16 %v1354, %v1350
    %v1895 = vpack.c.b16 %v1355, %v1351
    %v1896 = vpack.c.b16 %v1356, %v1352
    %v1897 = vpack.c.b16 %v1361, %v1357
    %v1898 = vpack.c.b16 %v1362, %v1358
    %v1899 = vpack.c.b16 %v1363, %v1359
    %v1900 = vpack.c.b16 %v1364, %v1360
    %v1901 = vpack.c.b16 %v1369, %v1365
    %v1902 = vpack.c.b16 %v1370, %v1366
    %v1903 = vpack.c.b16 %v1371, %v1367
    %v1904 = vpack.c.b16 %v1372, %v1368
    %v1905 = vpack.c.b16 %v1377, %v1373
    %v1906 = vpack.c.b16 %v1378, %v1374
    %v1907 = vpack.c.b16 %v1379, %v1375
    %v1908 = vpack.c.b16 %v1380, %v1376
    %v1909 = vpack.c.b16 %v1385, %v1381
    %v1910 = vpack.c.b16 %v1386, %v1382
    %v1911 = vpack.c.b16 %v1387, %v1383
    %v1912 = vpack.c.b16 %v1388, %v1384
    %v1913 = vpack.c.b16 %v1393, %v1389
    %v1914 = vpack.c.b16 %v1394, %v1390
    %v1915 = vpack.c.b16 %v1395, %v1391
    %v1916 = vpack.c.b16 %v1396, %v1392
    %v1917 = vpack.c.b16 %v1401, %v1397
    %v1918 = vpack.c.b16 %v1402, %v1398
    %v1919 = vpack.c.b16 %v1403, %v1399
    %v1920 = vpack.c.b16 %v1404, %v1400
    %v1921 = vpack.c.b16 %v1409, %v1405
    %v1922 = vpack.c.b16 %v1410, %v1406
    %v1923 = vpack.c.b16 %v1411, %v1407
    %v1924 = vpack.c.b16 %v1412, %v1408
    %v1925 = vpack.c.b16 %v1417, %v1413
    %v1926 = vpack.c.b16 %v1418, %v1414
    %v1927 = vpack.c.b16 %v1419, %v1415
    %v1928 = vpack.c.b16 %v1420, %v1416
    %v1929 = vpack.c.b16 %v1425, %v1421
    %v1930 = vpack.c.b16 %v1426, %v1422
    %v1931 = vpack.c.b16 %v1427, %v1423
    %v1932 = vpack.c.b16 %v1428, %v1424
    %v1933 = vpack.c.b16 %v1433, %v1429
    %v1934 = vpack.c.b16 %v1434, %v1430
    %v1935 = vpack.c.b16 %v1435, %v1431
    %v1936 = vpack.c.b16 %v1436, %v1432
    %v1937 = vpack.c.b16 %v1441, %v1437
    %v1938 = vpack.c.b16 %v1442, %v1438
    %v1939 = vpack.c.b16 %v1443, %v1439
    %v1940 = vpack.c.b16 %v1444, %v1440
    %v1941 = vpack.c.b16 %v1449, %v1445
    %v1942 = vpack.c.b16 %v1450, %v1446
    %v1943 = vpack.c.b16 %v1451, %v1447
    %v1944 = vpack.c.b16 %v1452, %v1448
    %v1945 = vpack.c.b16 %v1457, %v1453
    %v1946 = vpack.c.b16 %v1458, %v1454
    %v1947 = vpack.c.b16 %v1459, %v1455
    %v1948 = vpack.c.b16 %v1460, %v1456
    %v1949 = vpack.c.b16 %v1465, %v1461
    %v1950 = vpack.c.b16 %v1466, %v1462
    %v1951 = vpack.c.b16 %v1467, %v1463
    %v1952 = vpack.c.b16 %v1468, %v1464
    %v1953 = vpack.c.b16 %v1473, %v1469
    %v1954 = vpack.c.b16 %v1474, %v1470
    %v1955 = vpack.c.b16 %v1475, %v1471
    %v1956 = vpack.c.b16 %v1476, %v1472
    %v1957 = vpack.c.b16 %v1481, %v1477
    %v1958 = vpack.c.b16 %v1482, %v1478
    %v1959 = vpack.c.b16 %v1483, %v1479
    %v1960 = vpack.c.b16 %v1484, %v1480
    %v1961 = vpack.c.b16 %v1489, %v1485
    %v1962 = vpack.c.b16 %v1490, %v1486
    %v1963 = vpack.c.b16 %v1491, %v1487
    %v1964 = vpack.c.b16 %v1492, %v1488
    %v1965 = vpack.c.b16 %v1497, %v1493
    %v1966 = vpack.c.b16 %v1498, %v1494
    %v1967 = vpack.c.b16 %v1499, %v1495
    %v1968 = vpack.c.b16 %v1500, %v1496
    %v1969 = vpack.c.b16 %v1505, %v1501
    %v1970 = vpack.c.b16 %v1506, %v1502
    %v1971 = vpack.c.b16 %v1507, %v1503
    %v1972 = vpack.c.b16 %v1508, %v1504
    %v1973 = vpack.c.b16 %v1513, %v1509
    %v1974 = vpack.c.b16 %v1514, %v1510
    %v1975 = vpack.c.b16 %v1515, %v1511
    %v1976 = vpack.c.b16 %v1516, %v1512
    %v1977 = vpack.c.b16 %v1521, %v1517
    %v1978 = vpack.c.b16 %v1522, %v1518
    %v1979 = vpack.c.b16 %v1523, %v1519
    %v1980 = vpack.c.b16 %v1524, %v1520
    %v1981 = vpack.c.b16 %v1529, %v1525
    %v1982 = vpack.c.b16 %v1530, %v1526
    %v1983 = vpack.c.b16 %v1531, %v1527
    %v1984 = vpack.c.b16 %v1532, %v1528
    %v1985 = vpack.c.b16 %v1537, %v1533
    %v1986 = vpack.c.b16 %v1538, %v1534
    %v1987 = vpack.c.b16 %v1539, %v1535
    %v1988 = vpack.c.b16 %v1540, %v1536
    %v1989 = vpack.c.b16 %v1545, %v1541
    %v1990 = vpack.c.b16 %v1546, %v1542
    %v1991 = vpack.c.b16 %v1547, %v1543
    %v1992 = vpack.c.b16 %v1548, %v1544
    %v1993 = vpack.c.b16 %v1553, %v1549
    %v1994 = vpack.c.b16 %v1554, %v1550
    %v1995 = vpack.c.b16 %v1555, %v1551
    %v1996 = vpack.c.b16 %v1556, %v1552
    %v1997 = vpack.c.b16 %v1561, %v1557
    %v1998 = vpack.c.b16 %v1562, %v1558
    %v1999 = vpack.c.b16 %v1563, %v1559
    %v2000 = vpack.c.b16 %v1564, %v1560
    %v2001 = vpack.c.b16 %v1569, %v1565
    %v2002 = vpack.c.b16 %v1570, %v1566
    %v2003 = vpack.c.b16 %v1571, %v1567
    %v2004 = vpack.c.b16 %v1572, %v1568
    %v2005 = vpack.c.b16 %v1577, %v1573
    %v2006 = vpack.c.b16 %v1578, %v1574
    %v2007 = vpack.c.b16 %v1579, %v1575
    %v2008 = vpack.c.b16 %v1580, %v1576
    %v2009 = vpack.c.b16 %v1585, %v1581
    %v2010 = vpack.c.b16 %v1586, %v1582
    %v2011 = vpack.c.b16 %v1587, %v1583
    %v2012 = vpack.c.b16 %v1588, %v1584
    %v2013 = vpack.c.b16 %v1593, %v1589
    %v2014 = vpack.c.b16 %v1594, %v1590
    %v2015 = vpack.c.b16 %v1595, %v1591
    %v2016 = vpack.c.b16 %v1596, %v1592
    %v2017 = vpack.c.b16 %v1601, %v1597
    %v2018 = vpack.c.b16 %v1602, %v1598
    %v2019 = vpack.c.b16 %v1603, %v1599
    %v2020 = vpack.c.b16 %v1604, %v1600
    %v2021 = vpack.c.b16 %v1609, %v1605
    %v2022 = vpack.c.b16 %v1610, %v1606
    %v2023 = vpack.c.b16 %v1611, %v1607
    %v2024 = vpack.c.b16 %v1612, %v1608
    %v2025 = vpack.c.b16 %v1617, %v1613
    %v2026 = vpack.c.b16 %v1618, %v1614
    %v2027 = vpack.c.b16 %v1619, %v1615
    %v2028 = vpack.c.b16 %v1620, %v1616
    %v2029 = vpack.c.b16 %v1625, %v1621
    %v2030 = vpack.c.b16 %v1626, %v1622
    %v2031 = vpack.c.b16 %v1627, %v1623
    %v2032 = vpack.c.b16 %v1628, %v1624
    %v2033 = vpack.c.b16 %v1633, %v1629
    %v2034 = vpack.c.b16 %v1634, %v1630
    %v2035 = vpack.c.b16 %v1635, %v1631
    %v2036 = vpack.c.b16 %v1636, %v1632
    %v2037 = vpack.c.b16 %v1641, %v1637
    %v2038 = vpack.c.b16 %v1642, %v1638
    %v2039 = vpack.c.b16 %v1643, %v1639
    %v2040 = vpack.c.b16 %v1644, %v1640
    %v2041 = vpack.c.b16 %v1649, %v1645
    %v2042 = vpack.c.b16 %v1650, %v1646
    %v2043 = vpack.c.b16 %v1651, %v1647
    %v2044 = vpack.c.b16 %v1652, %v1648
    %v2045 = vpack.c.b16 %v1657, %v1653
    %v2046 = vpack.c.b16 %v1658, %v1654
    %v2047 = vpack.c.b16 %v1659, %v1655
    %v2048 = vpack.c.b16 %v1660, %v1656
    %v2049 = vpack.c.b16 %v1665, %v1661
    %v2050 = vpack.c.b16 %v1666, %v1662
    %v2051 = vpack.c.b16 %v1667, %v1663
    %v2052 = vpack.c.b16 %v1668, %v1664
    %2437 = vmatpush.bf16.msra.mxu0 %v1697
    %2438 = vmatpush.bf16.msra.mxu0 %v1693
    %2439 = vmatpush.bf16.msra.mxu0 %v1689
    %2440 = vmatpush.bf16.msra.mxu0 %v1685
    %2441 = vmatpush.bf16.msra.mxu0 %v1681
    %2442 = vmatpush.bf16.msra.mxu0 %v1677
    %2443 = vmatpush.bf16.msra.mxu0 %v1673
    %2444 = vmatpush.bf16.msra.mxu0 %v1669
    %2445 = vmatmul.bf16.gmra.mxu0 %v491
    %v2446 = vpop.f32.mrf.mxu0
    %v2447 = vadd.f32 %v481, %v2446
    %v2448 = vpop.f32.mrf.mxu0
    %2449 = vdwg.mxu0
    %2450 = vmatpush.bf16.msra.mxu0 %v1729
    %2451 = vmatpush.bf16.msra.mxu0 %v1725
    %2452 = vmatpush.bf16.msra.mxu0 %v1721
    %2453 = vmatpush.bf16.msra.mxu0 %v1717
    %2454 = vmatpush.bf16.msra.mxu0 %v1713
    %2455 = vmatpush.bf16.msra.mxu0 %v1709
    %2456 = vmatpush.bf16.msra.mxu0 %v1705
    %2457 = vmatpush.bf16.msra.mxu0 %v1701
    %2458 = vmatmul.bf16.gmra.mxu0 %v492
    %v2459 = vpop.f32.mrf.mxu0
    %v2460 = vadd.f32 %v2447, %v2459
    %v2461 = vpop.f32.mrf.mxu0
    %2462 = vdwg.mxu0
    %2463 = vmatpush.bf16.msra.mxu0 %v1761
    %2464 = vmatpush.bf16.msra.mxu0 %v1757
    %2465 = vmatpush.bf16.msra.mxu0 %v1753
    %2466 = vmatpush.bf16.msra.mxu0 %v1749
    %2467 = vmatpush.bf16.msra.mxu0 %v1745
    %2468 = vmatpush.bf16.msra.mxu0 %v1741
    %2469 = vmatpush.bf16.msra.mxu0 %v1737
    %2470 = vmatpush.bf16.msra.mxu0 %v1733
    %2471 = vmatmul.bf16.gmra.mxu0 %v493
    %v2472 = vpop.f32.mrf.mxu0
    %v2473 = vadd.f32 %v2460, %v2472
    %v2474 = vpop.f32.mrf.mxu0
    %2475 = vdwg.mxu0
    %2476 = vmatpush.bf16.msra.mxu0 %v1793
    %2477 = vmatpush.bf16.msra.mxu0 %v1789
    %2478 = vmatpush.bf16.msra.mxu0 %v1785
    %2479 = vmatpush.bf16.msra.mxu0 %v1781
    %2480 = vmatpush.bf16.msra.mxu0 %v1777
    %2481 = vmatpush.bf16.msra.mxu0 %v1773
    %2482 = vmatpush.bf16.msra.mxu0 %v1769
    %2483 = vmatpush.bf16.msra.mxu0 %v1765
    %2484 = vmatmul.bf16.gmra.mxu0 %v494
    %v2485 = vpop.f32.mrf.mxu0
    %v2486 = vadd.f32 %v2473, %v2485
    %v2487 = vpop.f32.mrf.mxu0
    %2488 = vdwg.mxu0
    %2489 = vmatpush.bf16.msra.mxu0 %v1825
    %2490 = vmatpush.bf16.msra.mxu0 %v1821
    %2491 = vmatpush.bf16.msra.mxu0 %v1817
    %2492 = vmatpush.bf16.msra.mxu0 %v1813
    %2493 = vmatpush.bf16.msra.mxu0 %v1809
    %2494 = vmatpush.bf16.msra.mxu0 %v1805
    %2495 = vmatpush.bf16.msra.mxu0 %v1801
    %2496 = vmatpush.bf16.msra.mxu0 %v1797
    %2497 = vmatmul.bf16.gmra.mxu0 %v495
    %v2498 = vpop.f32.mrf.mxu0
    %v2499 = vadd.f32 %v2486, %v2498
    %v2500 = vpop.f32.mrf.mxu0
    %2501 = vdwg.mxu0
    %2502 = vmatpush.bf16.msra.mxu0 %v1857
    %2503 = vmatpush.bf16.msra.mxu0 %v1853
    %2504 = vmatpush.bf16.msra.mxu0 %v1849
    %2505 = vmatpush.bf16.msra.mxu0 %v1845
    %2506 = vmatpush.bf16.msra.mxu0 %v1841
    %2507 = vmatpush.bf16.msra.mxu0 %v1837
    %2508 = vmatpush.bf16.msra.mxu0 %v1833
    %2509 = vmatpush.bf16.msra.mxu0 %v1829
    %2510 = vmatmul.bf16.gmra.mxu0 %v496
    %v2511 = vpop.f32.mrf.mxu0
    %v2512 = vadd.f32 %v2499, %v2511
    %v2513 = vpop.f32.mrf.mxu0
    %2514 = vdwg.mxu0
    %2515 = vmatpush.bf16.msra.mxu0 %v1889
    %2516 = vmatpush.bf16.msra.mxu0 %v1885
    %2517 = vmatpush.bf16.msra.mxu0 %v1881
    %2518 = vmatpush.bf16.msra.mxu0 %v1877
    %2519 = vmatpush.bf16.msra.mxu0 %v1873
    %2520 = vmatpush.bf16.msra.mxu0 %v1869
    %2521 = vmatpush.bf16.msra.mxu0 %v1865
    %2522 = vmatpush.bf16.msra.mxu0 %v1861
    %2523 = vmatmul.bf16.gmra.mxu0 %v497
    %v2524 = vpop.f32.mrf.mxu0
    %v2525 = vadd.f32 %v2512, %v2524
    %v2526 = vpop.f32.mrf.mxu0
    %2527 = vdwg.mxu0
    %2528 = vmatpush.bf16.msra.mxu0 %v1921
    %2529 = vmatpush.bf16.msra.mxu0 %v1917
    %2530 = vmatpush.bf16.msra.mxu0 %v1913
    %2531 = vmatpush.bf16.msra.mxu0 %v1909
    %2532 = vmatpush.bf16.msra.mxu0 %v1905
    %2533 = vmatpush.bf16.msra.mxu0 %v1901
    %2534 = vmatpush.bf16.msra.mxu0 %v1897
    %2535 = vmatpush.bf16.msra.mxu0 %v1893
    %2536 = vmatmul.bf16.gmra.mxu0 %v498
    %v2537 = vpop.f32.mrf.mxu0
    %v2538 = vadd.f32 %v2525, %v2537
    %v2539 = vpop.f32.mrf.mxu0
    %2540 = vdwg.mxu0
    %2541 = vmatpush.bf16.msra.mxu0 %v1953
    %2542 = vmatpush.bf16.msra.mxu0 %v1949
    %2543 = vmatpush.bf16.msra.mxu0 %v1945
    %2544 = vmatpush.bf16.msra.mxu0 %v1941
    %2545 = vmatpush.bf16.msra.mxu0 %v1937
    %2546 = vmatpush.bf16.msra.mxu0 %v1933
    %2547 = vmatpush.bf16.msra.mxu0 %v1929
    %2548 = vmatpush.bf16.msra.mxu0 %v1925
    %2549 = vmatmul.bf16.gmra.mxu0 %v501
    %v2550 = vpop.f32.mrf.mxu0
    %v2551 = vadd.f32 %v2538, %v2550
    %v2552 = vpop.f32.mrf.mxu0
    %2553 = vdwg.mxu0
    %2554 = vmatpush.bf16.msra.mxu0 %v1985
    %2555 = vmatpush.bf16.msra.mxu0 %v1981
    %2556 = vmatpush.bf16.msra.mxu0 %v1977
    %2557 = vmatpush.bf16.msra.mxu0 %v1973
    %2558 = vmatpush.bf16.msra.mxu0 %v1969
    %2559 = vmatpush.bf16.msra.mxu0 %v1965
    %2560 = vmatpush.bf16.msra.mxu0 %v1961
    %2561 = vmatpush.bf16.msra.mxu0 %v1957
    %2562 = vmatmul.bf16.gmra.mxu0 %v502
    %v2563 = vpop.f32.mrf.mxu0
    %v2564 = vadd.f32 %v2551, %v2563
    %v2565 = vpop.f32.mrf.mxu0
    %2566 = vdwg.mxu0
    %2567 = vmatpush.bf16.msra.mxu0 %v2017
    %2568 = vmatpush.bf16.msra.mxu0 %v2013
    %2569 = vmatpush.bf16.msra.mxu0 %v2009
    %2570 = vmatpush.bf16.msra.mxu0 %v2005
    %2571 = vmatpush.bf16.msra.mxu0 %v2001
    %2572 = vmatpush.bf16.msra.mxu0 %v1997
    %2573 = vmatpush.bf16.msra.mxu0 %v1993
    %2574 = vmatpush.bf16.msra.mxu0 %v1989
    %2575 = vmatmul.bf16.gmra.mxu0 %v503
    %v2576 = vpop.f32.mrf.mxu0
    %v2577 = vadd.f32 %v2564, %v2576
    %v2578 = vpop.f32.mrf.mxu0
    %2579 = vdwg.mxu0
    %2580 = vmatpush.bf16.msra.mxu0 %v2049
    %2581 = vmatpush.bf16.msra.mxu0 %v2045
    %2582 = vmatpush.bf16.msra.mxu0 %v2041
    %2583 = vmatpush.bf16.msra.mxu0 %v2037
    %2584 = vmatpush.bf16.msra.mxu0 %v2033
    %2585 = vmatpush.bf16.msra.mxu0 %v2029
    %2586 = vmatpush.bf16.msra.mxu0 %v2025
    %2587 = vmatpush.bf16.msra.mxu0 %v2021
    %2588 = vmatmul.bf16.gmra.mxu0 %v504
    %v2589 = vpop.f32.mrf.mxu0
    %v2590 = vadd.f32 %v2577, %v2589
    %v2591 = vpop.f32.mrf.mxu0
    %2592 = vdwg.mxu0
    %2593 = vmatpush.bf16.msra.mxu0 %v1698
    %2594 = vmatpush.bf16.msra.mxu0 %v1694
    %2595 = vmatpush.bf16.msra.mxu0 %v1690
    %2596 = vmatpush.bf16.msra.mxu0 %v1686
    %2597 = vmatpush.bf16.msra.mxu0 %v1682
    %2598 = vmatpush.bf16.msra.mxu0 %v1678
    %2599 = vmatpush.bf16.msra.mxu0 %v1674
    %2600 = vmatpush.bf16.msra.mxu0 %v1670
    %2601 = vmatmul.bf16.gmra.mxu0 %v491
    %v2602 = vpop.f32.mrf.mxu0
    %v2603 = vadd.f32 %v482, %v2602
    %v2604 = vpop.f32.mrf.mxu0
    %2605 = vdwg.mxu0
    %2606 = vmatpush.bf16.msra.mxu0 %v1730
    %2607 = vmatpush.bf16.msra.mxu0 %v1726
    %2608 = vmatpush.bf16.msra.mxu0 %v1722
    %2609 = vmatpush.bf16.msra.mxu0 %v1718
    %2610 = vmatpush.bf16.msra.mxu0 %v1714
    %2611 = vmatpush.bf16.msra.mxu0 %v1710
    %2612 = vmatpush.bf16.msra.mxu0 %v1706
    %2613 = vmatpush.bf16.msra.mxu0 %v1702
    %2614 = vmatmul.bf16.gmra.mxu0 %v492
    %v2615 = vpop.f32.mrf.mxu0
    %v2616 = vadd.f32 %v2603, %v2615
    %v2617 = vpop.f32.mrf.mxu0
    %2618 = vdwg.mxu0
    %2619 = vmatpush.bf16.msra.mxu0 %v1762
    %2620 = vmatpush.bf16.msra.mxu0 %v1758
    %2621 = vmatpush.bf16.msra.mxu0 %v1754
    %2622 = vmatpush.bf16.msra.mxu0 %v1750
    %2623 = vmatpush.bf16.msra.mxu0 %v1746
    %2624 = vmatpush.bf16.msra.mxu0 %v1742
    %2625 = vmatpush.bf16.msra.mxu0 %v1738
    %2626 = vmatpush.bf16.msra.mxu0 %v1734
    %2627 = vmatmul.bf16.gmra.mxu0 %v493
    %v2628 = vpop.f32.mrf.mxu0
    %v2629 = vadd.f32 %v2616, %v2628
    %v2630 = vpop.f32.mrf.mxu0
    %2631 = vdwg.mxu0
    %2632 = vmatpush.bf16.msra.mxu0 %v1794
    %2633 = vmatpush.bf16.msra.mxu0 %v1790
    %2634 = vmatpush.bf16.msra.mxu0 %v1786
    %2635 = vmatpush.bf16.msra.mxu0 %v1782
    %2636 = vmatpush.bf16.msra.mxu0 %v1778
    %2637 = vmatpush.bf16.msra.mxu0 %v1774
    %2638 = vmatpush.bf16.msra.mxu0 %v1770
    %2639 = vmatpush.bf16.msra.mxu0 %v1766
    %2640 = vmatmul.bf16.gmra.mxu0 %v494
    %v2641 = vpop.f32.mrf.mxu0
    %v2642 = vadd.f32 %v2629, %v2641
    %v2643 = vpop.f32.mrf.mxu0
    %2644 = vdwg.mxu0
    %2645 = vmatpush.bf16.msra.mxu0 %v1826
    %2646 = vmatpush.bf16.msra.mxu0 %v1822
    %2647 = vmatpush.bf16.msra.mxu0 %v1818
    %2648 = vmatpush.bf16.msra.mxu0 %v1814
    %2649 = vmatpush.bf16.msra.mxu0 %v1810
    %2650 = vmatpush.bf16.msra.mxu0 %v1806
    %2651 = vmatpush.bf16.msra.mxu0 %v1802
    %2652 = vmatpush.bf16.msra.mxu0 %v1798
    %2653 = vmatmul.bf16.gmra.mxu0 %v495
    %v2654 = vpop.f32.mrf.mxu0
    %v2655 = vadd.f32 %v2642, %v2654
    %v2656 = vpop.f32.mrf.mxu0
    %2657 = vdwg.mxu0
    %2658 = vmatpush.bf16.msra.mxu0 %v1858
    %2659 = vmatpush.bf16.msra.mxu0 %v1854
    %2660 = vmatpush.bf16.msra.mxu0 %v1850
    %2661 = vmatpush.bf16.msra.mxu0 %v1846
    %2662 = vmatpush.bf16.msra.mxu0 %v1842
    %2663 = vmatpush.bf16.msra.mxu0 %v1838
    %2664 = vmatpush.bf16.msra.mxu0 %v1834
    %2665 = vmatpush.bf16.msra.mxu0 %v1830
    %2666 = vmatmul.bf16.gmra.mxu0 %v496
    %v2667 = vpop.f32.mrf.mxu0
    %v2668 = vadd.f32 %v2655, %v2667
    %v2669 = vpop.f32.mrf.mxu0
    %2670 = vdwg.mxu0
    %2671 = vmatpush.bf16.msra.mxu0 %v1890
    %2672 = vmatpush.bf16.msra.mxu0 %v1886
    %2673 = vmatpush.bf16.msra.mxu0 %v1882
    %2674 = vmatpush.bf16.msra.mxu0 %v1878
    %2675 = vmatpush.bf16.msra.mxu0 %v1874
    %2676 = vmatpush.bf16.msra.mxu0 %v1870
    %2677 = vmatpush.bf16.msra.mxu0 %v1866
    %2678 = vmatpush.bf16.msra.mxu0 %v1862
    %2679 = vmatmul.bf16.gmra.mxu0 %v497
    %v2680 = vpop.f32.mrf.mxu0
    %v2681 = vadd.f32 %v2668, %v2680
    %v2682 = vpop.f32.mrf.mxu0
    %2683 = vdwg.mxu0
    %2684 = vmatpush.bf16.msra.mxu0 %v1922
    %2685 = vmatpush.bf16.msra.mxu0 %v1918
    %2686 = vmatpush.bf16.msra.mxu0 %v1914
    %2687 = vmatpush.bf16.msra.mxu0 %v1910
    %2688 = vmatpush.bf16.msra.mxu0 %v1906
    %2689 = vmatpush.bf16.msra.mxu0 %v1902
    %2690 = vmatpush.bf16.msra.mxu0 %v1898
    %2691 = vmatpush.bf16.msra.mxu0 %v1894
    %2692 = vmatmul.bf16.gmra.mxu0 %v498
    %v2693 = vpop.f32.mrf.mxu0
    %v2694 = vadd.f32 %v2681, %v2693
    %v2695 = vpop.f32.mrf.mxu0
    %2696 = vdwg.mxu0
    %2697 = vmatpush.bf16.msra.mxu0 %v1954
    %2698 = vmatpush.bf16.msra.mxu0 %v1950
    %2699 = vmatpush.bf16.msra.mxu0 %v1946
    %2700 = vmatpush.bf16.msra.mxu0 %v1942
    %2701 = vmatpush.bf16.msra.mxu0 %v1938
    %2702 = vmatpush.bf16.msra.mxu0 %v1934
    %2703 = vmatpush.bf16.msra.mxu0 %v1930
    %2704 = vmatpush.bf16.msra.mxu0 %v1926
    %2705 = vmatmul.bf16.gmra.mxu0 %v501
    %v2706 = vpop.f32.mrf.mxu0
    %v2707 = vadd.f32 %v2694, %v2706
    %v2708 = vpop.f32.mrf.mxu0
    %2709 = vdwg.mxu0
    %2710 = vmatpush.bf16.msra.mxu0 %v1986
    %2711 = vmatpush.bf16.msra.mxu0 %v1982
    %2712 = vmatpush.bf16.msra.mxu0 %v1978
    %2713 = vmatpush.bf16.msra.mxu0 %v1974
    %2714 = vmatpush.bf16.msra.mxu0 %v1970
    %2715 = vmatpush.bf16.msra.mxu0 %v1966
    %2716 = vmatpush.bf16.msra.mxu0 %v1962
    %2717 = vmatpush.bf16.msra.mxu0 %v1958
    %2718 = vmatmul.bf16.gmra.mxu0 %v502
    %v2719 = vpop.f32.mrf.mxu0
    %v2720 = vadd.f32 %v2707, %v2719
    %v2721 = vpop.f32.mrf.mxu0
    %2722 = vdwg.mxu0
    %2723 = vmatpush.bf16.msra.mxu0 %v2018
    %2724 = vmatpush.bf16.msra.mxu0 %v2014
    %2725 = vmatpush.bf16.msra.mxu0 %v2010
    %2726 = vmatpush.bf16.msra.mxu0 %v2006
    %2727 = vmatpush.bf16.msra.mxu0 %v2002
    %2728 = vmatpush.bf16.msra.mxu0 %v1998
    %2729 = vmatpush.bf16.msra.mxu0 %v1994
    %2730 = vmatpush.bf16.msra.mxu0 %v1990
    %2731 = vmatmul.bf16.gmra.mxu0 %v503
    %v2732 = vpop.f32.mrf.mxu0
    %v2733 = vadd.f32 %v2720, %v2732
    %v2734 = vpop.f32.mrf.mxu0
    %2735 = vdwg.mxu0
    %2736 = vmatpush.bf16.msra.mxu0 %v2050
    %2737 = vmatpush.bf16.msra.mxu0 %v2046
    %2738 = vmatpush.bf16.msra.mxu0 %v2042
    %2739 = vmatpush.bf16.msra.mxu0 %v2038
    %2740 = vmatpush.bf16.msra.mxu0 %v2034
    %2741 = vmatpush.bf16.msra.mxu0 %v2030
    %2742 = vmatpush.bf16.msra.mxu0 %v2026
    %2743 = vmatpush.bf16.msra.mxu0 %v2022
    %2744 = vmatmul.bf16.gmra.mxu0 %v504
    %v2745 = vpop.f32.mrf.mxu0
    %v2746 = vadd.f32 %v2733, %v2745
    %v2747 = vpop.f32.mrf.mxu0
    %2748 = vdwg.mxu0
    %2749 = vmatpush.bf16.msra.mxu0 %v1699
    %2750 = vmatpush.bf16.msra.mxu0 %v1695
    %2751 = vmatpush.bf16.msra.mxu0 %v1691
    %2752 = vmatpush.bf16.msra.mxu0 %v1687
    %2753 = vmatpush.bf16.msra.mxu0 %v1683
    %2754 = vmatpush.bf16.msra.mxu0 %v1679
    %2755 = vmatpush.bf16.msra.mxu0 %v1675
    %2756 = vmatpush.bf16.msra.mxu0 %v1671
    %2757 = vmatmul.bf16.gmra.mxu0 %v491
    %v2758 = vpop.f32.mrf.mxu0
    %v2759 = vadd.f32 %v483, %v2758
    %v2760 = vpop.f32.mrf.mxu0
    %2761 = vdwg.mxu0
    %2762 = vmatpush.bf16.msra.mxu0 %v1731
    %2763 = vmatpush.bf16.msra.mxu0 %v1727
    %2764 = vmatpush.bf16.msra.mxu0 %v1723
    %2765 = vmatpush.bf16.msra.mxu0 %v1719
    %2766 = vmatpush.bf16.msra.mxu0 %v1715
    %2767 = vmatpush.bf16.msra.mxu0 %v1711
    %2768 = vmatpush.bf16.msra.mxu0 %v1707
    %2769 = vmatpush.bf16.msra.mxu0 %v1703
    %2770 = vmatmul.bf16.gmra.mxu0 %v492
    %v2771 = vpop.f32.mrf.mxu0
    %v2772 = vadd.f32 %v2759, %v2771
    %v2773 = vpop.f32.mrf.mxu0
    %2774 = vdwg.mxu0
    %2775 = vmatpush.bf16.msra.mxu0 %v1763
    %2776 = vmatpush.bf16.msra.mxu0 %v1759
    %2777 = vmatpush.bf16.msra.mxu0 %v1755
    %2778 = vmatpush.bf16.msra.mxu0 %v1751
    %2779 = vmatpush.bf16.msra.mxu0 %v1747
    %2780 = vmatpush.bf16.msra.mxu0 %v1743
    %2781 = vmatpush.bf16.msra.mxu0 %v1739
    %2782 = vmatpush.bf16.msra.mxu0 %v1735
    %2783 = vmatmul.bf16.gmra.mxu0 %v493
    %v2784 = vpop.f32.mrf.mxu0
    %v2785 = vadd.f32 %v2772, %v2784
    %v2786 = vpop.f32.mrf.mxu0
    %2787 = vdwg.mxu0
    %2788 = vmatpush.bf16.msra.mxu0 %v1795
    %2789 = vmatpush.bf16.msra.mxu0 %v1791
    %2790 = vmatpush.bf16.msra.mxu0 %v1787
    %2791 = vmatpush.bf16.msra.mxu0 %v1783
    %2792 = vmatpush.bf16.msra.mxu0 %v1779
    %2793 = vmatpush.bf16.msra.mxu0 %v1775
    %2794 = vmatpush.bf16.msra.mxu0 %v1771
    %2795 = vmatpush.bf16.msra.mxu0 %v1767
    %2796 = vmatmul.bf16.gmra.mxu0 %v494
    %v2797 = vpop.f32.mrf.mxu0
    %v2798 = vadd.f32 %v2785, %v2797
    %v2799 = vpop.f32.mrf.mxu0
    %2800 = vdwg.mxu0
    %2801 = vmatpush.bf16.msra.mxu0 %v1827
    %2802 = vmatpush.bf16.msra.mxu0 %v1823
    %2803 = vmatpush.bf16.msra.mxu0 %v1819
    %2804 = vmatpush.bf16.msra.mxu0 %v1815
    %2805 = vmatpush.bf16.msra.mxu0 %v1811
    %2806 = vmatpush.bf16.msra.mxu0 %v1807
    %2807 = vmatpush.bf16.msra.mxu0 %v1803
    %2808 = vmatpush.bf16.msra.mxu0 %v1799
    %2809 = vmatmul.bf16.gmra.mxu0 %v495
    %v2810 = vpop.f32.mrf.mxu0
    %v2811 = vadd.f32 %v2798, %v2810
    %v2812 = vpop.f32.mrf.mxu0
    %2813 = vdwg.mxu0
    %2814 = vmatpush.bf16.msra.mxu0 %v1859
    %2815 = vmatpush.bf16.msra.mxu0 %v1855
    %2816 = vmatpush.bf16.msra.mxu0 %v1851
    %2817 = vmatpush.bf16.msra.mxu0 %v1847
    %2818 = vmatpush.bf16.msra.mxu0 %v1843
    %2819 = vmatpush.bf16.msra.mxu0 %v1839
    %2820 = vmatpush.bf16.msra.mxu0 %v1835
    %2821 = vmatpush.bf16.msra.mxu0 %v1831
    %2822 = vmatmul.bf16.gmra.mxu0 %v496
    %v2823 = vpop.f32.mrf.mxu0
    %v2824 = vadd.f32 %v2811, %v2823
    %v2825 = vpop.f32.mrf.mxu0
    %2826 = vdwg.mxu0
    %2827 = vmatpush.bf16.msra.mxu0 %v1891
    %2828 = vmatpush.bf16.msra.mxu0 %v1887
    %2829 = vmatpush.bf16.msra.mxu0 %v1883
    %2830 = vmatpush.bf16.msra.mxu0 %v1879
    %2831 = vmatpush.bf16.msra.mxu0 %v1875
    %2832 = vmatpush.bf16.msra.mxu0 %v1871
    %2833 = vmatpush.bf16.msra.mxu0 %v1867
    %2834 = vmatpush.bf16.msra.mxu0 %v1863
    %2835 = vmatmul.bf16.gmra.mxu0 %v497
    %v2836 = vpop.f32.mrf.mxu0
    %v2837 = vadd.f32 %v2824, %v2836
    %v2838 = vpop.f32.mrf.mxu0
    %2839 = vdwg.mxu0
    %2840 = vmatpush.bf16.msra.mxu0 %v1923
    %2841 = vmatpush.bf16.msra.mxu0 %v1919
    %2842 = vmatpush.bf16.msra.mxu0 %v1915
    %2843 = vmatpush.bf16.msra.mxu0 %v1911
    %2844 = vmatpush.bf16.msra.mxu0 %v1907
    %2845 = vmatpush.bf16.msra.mxu0 %v1903
    %2846 = vmatpush.bf16.msra.mxu0 %v1899
    %2847 = vmatpush.bf16.msra.mxu0 %v1895
    %2848 = vmatmul.bf16.gmra.mxu0 %v498
    %v2849 = vpop.f32.mrf.mxu0
    %v2850 = vadd.f32 %v2837, %v2849
    %v2851 = vpop.f32.mrf.mxu0
    %2852 = vdwg.mxu0
    %2853 = vmatpush.bf16.msra.mxu0 %v1955
    %2854 = vmatpush.bf16.msra.mxu0 %v1951
    %2855 = vmatpush.bf16.msra.mxu0 %v1947
    %2856 = vmatpush.bf16.msra.mxu0 %v1943
    %2857 = vmatpush.bf16.msra.mxu0 %v1939
    %2858 = vmatpush.bf16.msra.mxu0 %v1935
    %2859 = vmatpush.bf16.msra.mxu0 %v1931
    %2860 = vmatpush.bf16.msra.mxu0 %v1927
    %2861 = vmatmul.bf16.gmra.mxu0 %v501
    %v2862 = vpop.f32.mrf.mxu0
    %v2863 = vadd.f32 %v2850, %v2862
    %v2864 = vpop.f32.mrf.mxu0
    %2865 = vdwg.mxu0
    %2866 = vmatpush.bf16.msra.mxu0 %v1987
    %2867 = vmatpush.bf16.msra.mxu0 %v1983
    %2868 = vmatpush.bf16.msra.mxu0 %v1979
    %2869 = vmatpush.bf16.msra.mxu0 %v1975
    %2870 = vmatpush.bf16.msra.mxu0 %v1971
    %2871 = vmatpush.bf16.msra.mxu0 %v1967
    %2872 = vmatpush.bf16.msra.mxu0 %v1963
    %2873 = vmatpush.bf16.msra.mxu0 %v1959
    %2874 = vmatmul.bf16.gmra.mxu0 %v502
    %v2875 = vpop.f32.mrf.mxu0
    %v2876 = vadd.f32 %v2863, %v2875
    %v2877 = vpop.f32.mrf.mxu0
    %2878 = vdwg.mxu0
    %2879 = vmatpush.bf16.msra.mxu0 %v2019
    %2880 = vmatpush.bf16.msra.mxu0 %v2015
    %2881 = vmatpush.bf16.msra.mxu0 %v2011
    %2882 = vmatpush.bf16.msra.mxu0 %v2007
    %2883 = vmatpush.bf16.msra.mxu0 %v2003
    %2884 = vmatpush.bf16.msra.mxu0 %v1999
    %2885 = vmatpush.bf16.msra.mxu0 %v1995
    %2886 = vmatpush.bf16.msra.mxu0 %v1991
    %2887 = vmatmul.bf16.gmra.mxu0 %v503
    %v2888 = vpop.f32.mrf.mxu0
    %v2889 = vadd.f32 %v2876, %v2888
    %v2890 = vpop.f32.mrf.mxu0
    %2891 = vdwg.mxu0
    %2892 = vmatpush.bf16.msra.mxu0 %v2051
    %2893 = vmatpush.bf16.msra.mxu0 %v2047
    %2894 = vmatpush.bf16.msra.mxu0 %v2043
    %2895 = vmatpush.bf16.msra.mxu0 %v2039
    %2896 = vmatpush.bf16.msra.mxu0 %v2035
    %2897 = vmatpush.bf16.msra.mxu0 %v2031
    %2898 = vmatpush.bf16.msra.mxu0 %v2027
    %2899 = vmatpush.bf16.msra.mxu0 %v2023
    %2900 = vmatmul.bf16.gmra.mxu0 %v504
    %v2901 = vpop.f32.mrf.mxu0
    %v2902 = vadd.f32 %v2889, %v2901
    %v2903 = vpop.f32.mrf.mxu0
    %2904 = vdwg.mxu0
    %2905 = vmatpush.bf16.msra.mxu0 %v1700
    %2906 = vmatpush.bf16.msra.mxu0 %v1696
    %2907 = vmatpush.bf16.msra.mxu0 %v1692
    %2908 = vmatpush.bf16.msra.mxu0 %v1688
    %2909 = vmatpush.bf16.msra.mxu0 %v1684
    %2910 = vmatpush.bf16.msra.mxu0 %v1680
    %2911 = vmatpush.bf16.msra.mxu0 %v1676
    %2912 = vmatpush.bf16.msra.mxu0 %v1672
    %2913 = vmatmul.bf16.gmra.mxu0 %v491
    %v2914 = vpop.f32.mrf.mxu0
    %v2915 = vadd.f32 %v484, %v2914
    %v2916 = vpop.f32.mrf.mxu0
    %2917 = vdwg.mxu0
    %2918 = vmatpush.bf16.msra.mxu0 %v1732
    %2919 = vmatpush.bf16.msra.mxu0 %v1728
    %2920 = vmatpush.bf16.msra.mxu0 %v1724
    %2921 = vmatpush.bf16.msra.mxu0 %v1720
    %2922 = vmatpush.bf16.msra.mxu0 %v1716
    %2923 = vmatpush.bf16.msra.mxu0 %v1712
    %2924 = vmatpush.bf16.msra.mxu0 %v1708
    %2925 = vmatpush.bf16.msra.mxu0 %v1704
    %2926 = vmatmul.bf16.gmra.mxu0 %v492
    %v2927 = vpop.f32.mrf.mxu0
    %v2928 = vadd.f32 %v2915, %v2927
    %v2929 = vpop.f32.mrf.mxu0
    %2930 = vdwg.mxu0
    %2931 = vmatpush.bf16.msra.mxu0 %v1764
    %2932 = vmatpush.bf16.msra.mxu0 %v1760
    %2933 = vmatpush.bf16.msra.mxu0 %v1756
    %2934 = vmatpush.bf16.msra.mxu0 %v1752
    %2935 = vmatpush.bf16.msra.mxu0 %v1748
    %2936 = vmatpush.bf16.msra.mxu0 %v1744
    %2937 = vmatpush.bf16.msra.mxu0 %v1740
    %2938 = vmatpush.bf16.msra.mxu0 %v1736
    %2939 = vmatmul.bf16.gmra.mxu0 %v493
    %v2940 = vpop.f32.mrf.mxu0
    %v2941 = vadd.f32 %v2928, %v2940
    %v2942 = vpop.f32.mrf.mxu0
    %2943 = vdwg.mxu0
    %2944 = vmatpush.bf16.msra.mxu0 %v1796
    %2945 = vmatpush.bf16.msra.mxu0 %v1792
    %2946 = vmatpush.bf16.msra.mxu0 %v1788
    %2947 = vmatpush.bf16.msra.mxu0 %v1784
    %2948 = vmatpush.bf16.msra.mxu0 %v1780
    %2949 = vmatpush.bf16.msra.mxu0 %v1776
    %2950 = vmatpush.bf16.msra.mxu0 %v1772
    %2951 = vmatpush.bf16.msra.mxu0 %v1768
    %2952 = vmatmul.bf16.gmra.mxu0 %v494
    %v2953 = vpop.f32.mrf.mxu0
    %v2954 = vadd.f32 %v2941, %v2953
    %v2955 = vpop.f32.mrf.mxu0
    %2956 = vdwg.mxu0
    %2957 = vmatpush.bf16.msra.mxu0 %v1828
    %2958 = vmatpush.bf16.msra.mxu0 %v1824
    %2959 = vmatpush.bf16.msra.mxu0 %v1820
    %2960 = vmatpush.bf16.msra.mxu0 %v1816
    %2961 = vmatpush.bf16.msra.mxu0 %v1812
    %2962 = vmatpush.bf16.msra.mxu0 %v1808
    %2963 = vmatpush.bf16.msra.mxu0 %v1804
    %2964 = vmatpush.bf16.msra.mxu0 %v1800
    %2965 = vmatmul.bf16.gmra.mxu0 %v495
    %v2966 = vpop.f32.mrf.mxu0
    %v2967 = vadd.f32 %v2954, %v2966
    %v2968 = vpop.f32.mrf.mxu0
    %2969 = vdwg.mxu0
    %2970 = vmatpush.bf16.msra.mxu0 %v1860
    %2971 = vmatpush.bf16.msra.mxu0 %v1856
    %2972 = vmatpush.bf16.msra.mxu0 %v1852
    %2973 = vmatpush.bf16.msra.mxu0 %v1848
    %2974 = vmatpush.bf16.msra.mxu0 %v1844
    %2975 = vmatpush.bf16.msra.mxu0 %v1840
    %2976 = vmatpush.bf16.msra.mxu0 %v1836
    %2977 = vmatpush.bf16.msra.mxu0 %v1832
    %2978 = vmatmul.bf16.gmra.mxu0 %v496
    %v2979 = vpop.f32.mrf.mxu0
    %v2980 = vadd.f32 %v2967, %v2979
    %v2981 = vpop.f32.mrf.mxu0
    %2982 = vdwg.mxu0
    %2983 = vmatpush.bf16.msra.mxu0 %v1892
    %2984 = vmatpush.bf16.msra.mxu0 %v1888
    %2985 = vmatpush.bf16.msra.mxu0 %v1884
    %2986 = vmatpush.bf16.msra.mxu0 %v1880
    %2987 = vmatpush.bf16.msra.mxu0 %v1876
    %2988 = vmatpush.bf16.msra.mxu0 %v1872
    %2989 = vmatpush.bf16.msra.mxu0 %v1868
    %2990 = vmatpush.bf16.msra.mxu0 %v1864
    %2991 = vmatmul.bf16.gmra.mxu0 %v497
    %v2992 = vpop.f32.mrf.mxu0
    %v2993 = vadd.f32 %v2980, %v2992
    %v2994 = vpop.f32.mrf.mxu0
    %2995 = vdwg.mxu0
    %2996 = vmatpush.bf16.msra.mxu0 %v1924
    %2997 = vmatpush.bf16.msra.mxu0 %v1920
    %2998 = vmatpush.bf16.msra.mxu0 %v1916
    %2999 = vmatpush.bf16.msra.mxu0 %v1912
    %3000 = vmatpush.bf16.msra.mxu0 %v1908
    %3001 = vmatpush.bf16.msra.mxu0 %v1904
    %3002 = vmatpush.bf16.msra.mxu0 %v1900
    %3003 = vmatpush.bf16.msra.mxu0 %v1896
    %3004 = vmatmul.bf16.gmra.mxu0 %v498
    %v3005 = vpop.f32.mrf.mxu0
    %v3006 = vadd.f32 %v2993, %v3005
    %v3007 = vpop.f32.mrf.mxu0
    %3008 = vdwg.mxu0
    %3009 = vmatpush.bf16.msra.mxu0 %v1956
    %3010 = vmatpush.bf16.msra.mxu0 %v1952
    %3011 = vmatpush.bf16.msra.mxu0 %v1948
    %3012 = vmatpush.bf16.msra.mxu0 %v1944
    %3013 = vmatpush.bf16.msra.mxu0 %v1940
    %3014 = vmatpush.bf16.msra.mxu0 %v1936
    %3015 = vmatpush.bf16.msra.mxu0 %v1932
    %3016 = vmatpush.bf16.msra.mxu0 %v1928
    %3017 = vmatmul.bf16.gmra.mxu0 %v501
    %v3018 = vpop.f32.mrf.mxu0
    %v3019 = vadd.f32 %v3006, %v3018
    %v3020 = vpop.f32.mrf.mxu0
    %3021 = vdwg.mxu0
    %3022 = vmatpush.bf16.msra.mxu0 %v1988
    %3023 = vmatpush.bf16.msra.mxu0 %v1984
    %3024 = vmatpush.bf16.msra.mxu0 %v1980
    %3025 = vmatpush.bf16.msra.mxu0 %v1976
    %3026 = vmatpush.bf16.msra.mxu0 %v1972
    %3027 = vmatpush.bf16.msra.mxu0 %v1968
    %3028 = vmatpush.bf16.msra.mxu0 %v1964
    %3029 = vmatpush.bf16.msra.mxu0 %v1960
    %3030 = vmatmul.bf16.gmra.mxu0 %v502
    %v3031 = vpop.f32.mrf.mxu0
    %v3032 = vadd.f32 %v3019, %v3031
    %v3033 = vpop.f32.mrf.mxu0
    %3034 = vdwg.mxu0
    %3035 = vmatpush.bf16.msra.mxu0 %v2020
    %3036 = vmatpush.bf16.msra.mxu0 %v2016
    %3037 = vmatpush.bf16.msra.mxu0 %v2012
    %3038 = vmatpush.bf16.msra.mxu0 %v2008
    %3039 = vmatpush.bf16.msra.mxu0 %v2004
    %3040 = vmatpush.bf16.msra.mxu0 %v2000
    %3041 = vmatpush.bf16.msra.mxu0 %v1996
    %3042 = vmatpush.bf16.msra.mxu0 %v1992
    %3043 = vmatmul.bf16.gmra.mxu0 %v503
    %v3044 = vpop.f32.mrf.mxu0
    %v3045 = vadd.f32 %v3032, %v3044
    %v3046 = vpop.f32.mrf.mxu0
    %3047 = vdwg.mxu0
    %3048 = vmatpush.bf16.msra.mxu0 %v2052
    %3049 = vmatpush.bf16.msra.mxu0 %v2048
    %3050 = vmatpush.bf16.msra.mxu0 %v2044
    %3051 = vmatpush.bf16.msra.mxu0 %v2040
    %3052 = vmatpush.bf16.msra.mxu0 %v2036
    %3053 = vmatpush.bf16.msra.mxu0 %v2032
    %3054 = vmatpush.bf16.msra.mxu0 %v2028
    %3055 = vmatpush.bf16.msra.mxu0 %v2024
    %3056 = vmatmul.bf16.gmra.mxu0 %v504
    %v3057 = vpop.f32.mrf.mxu0
    %v3058 = vadd.f32 %v3045, %v3057
    %v3059 = vpop.f32.mrf.mxu0
    %3060 = vdwg.mxu0
    %v3061 = vmax.f32 %v2590, 0.0
    %v3062 = vmax.f32 %v2746, 0.0
    %v3063 = vmax.f32 %v2902, 0.0
    %v3064 = vmax.f32 %v3058, 0.0
    %v3065 = vpack.c.bf16 %v3061, %v3061
    %v3066 = vpack.c.bf16 %v3062, %v3062
    %v3067 = vpack.c.bf16 %v3063, %v3063
    %v3068 = vpack.c.bf16 %v3064, %v3064
    %v3069 = vld [vmem:[#allocation8] sm:$0xf]
    %v3070 = vld [vmem:[#allocation8 + $0x4] sm:$0xf]
    %v3071 = vld [vmem:[#allocation8 + $0x8] sm:$0xf]
    %v3072 = vld [vmem:[#allocation8 + $0xc] sm:$0xf]
    %v3073 = vld [vmem:[#allocation8 + $0x10] sm:$0xf]
    %v3074 = vld [vmem:[#allocation8 + $0x14] sm:$0xf]
    %v3075 = vld [vmem:[#allocation8 + $0x18] sm:$0xf]
    %v3076 = vld [vmem:[#allocation8 + $0x1c] sm:$0xf]
    %v3077 = vld [vmem:[#allocation8 + $0x20] sm:$0xf]
    %v3078 = vld [vmem:[#allocation8 + $0x24] sm:$0xf]
    %v3079 = vld [vmem:[#allocation8 + $0x28] sm:$0xf]
    %v3080 = vld [vmem:[#allocation8 + $0x2c] sm:$0xf]
    %v3081 = vld [vmem:[#allocation8 + $0x30] sm:$0xf]
    %v3082 = vld [vmem:[#allocation8 + $0x34] sm:$0xf]
    %v3083 = vld [vmem:[#allocation8 + $0x38] sm:$0xf]
    %v3084 = vld [vmem:[#allocation8 + $0x3c] sm:$0xf]
    %v3085 = vld [vmem:[#allocation8 + $0x40] sm:$0xf]
    %v3086 = vld [vmem:[#allocation8 + $0x44] sm:$0xf]
    %v3087 = vld [vmem:[#allocation8 + $0x48] sm:$0xf]
    %v3088 = vld [vmem:[#allocation8 + $0x4c] sm:$0xf]
    %v3089 = vld [vmem:[#allocation8 + $0x50] sm:$0xf]
    %v3090 = vld [vmem:[#allocation8 + $0x54] sm:$0xf]
    %v3091 = vld [vmem:[#allocation8 + $0x58] sm:$0xf]
    %v3092 = vld [vmem:[#allocation8 + $0x5c] sm:$0xf]
    %v3093 = vld [vmem:[#allocation8 + $0x60] sm:$0xf]
    %v3094 = vld [vmem:[#allocation8 + $0x64] sm:$0xf]
    %v3095 = vld [vmem:[#allocation8 + $0x68] sm:$0xf]
    %v3096 = vld [vmem:[#allocation8 + $0x6c] sm:$0xf]
    %v3097 = vld [vmem:[#allocation8 + $0x70] sm:$0xf]
    %v3098 = vld [vmem:[#allocation8 + $0x74] sm:$0xf]
    %v3099 = vld [vmem:[#allocation8 + $0x78] sm:$0xf]
    %v3100 = vld [vmem:[#allocation8 + $0x7c] sm:$0xf]
    %v3101 = vld [vmem:[#allocation8 + $0x80] sm:$0xf]
    %v3102 = vld [vmem:[#allocation8 + $0x84] sm:$0xf]
    %v3103 = vld [vmem:[#allocation8 + $0x88] sm:$0xf]
    %v3104 = vld [vmem:[#allocation8 + $0x8c] sm:$0xf]
    %v3105 = vld [vmem:[#allocation8 + $0x90] sm:$0xf]
    %v3106 = vld [vmem:[#allocation8 + $0x94] sm:$0xf]
    %v3107 = vld [vmem:[#allocation8 + $0x98] sm:$0xf]
    %v3108 = vld [vmem:[#allocation8 + $0x9c] sm:$0xf]
    %v3109 = vld [vmem:[#allocation8 + $0xa0] sm:$0xf]
    %v3110 = vld [vmem:[#allocation8 + $0xa4] sm:$0xf]
    %v3111 = vld [vmem:[#allocation8 + $0xa8] sm:$0xf]
    %v3112 = vld [vmem:[#allocation8 + $0xac] sm:$0xf]
    %v3113 = vld [vmem:[#allocation8 + $0xb0] sm:$0xf]
    %v3114 = vld [vmem:[#allocation8 + $0xb4] sm:$0xf]
    %v3115 = vld [vmem:[#allocation8 + $0xb8] sm:$0xf]
    %v3116 = vld [vmem:[#allocation8 + $0xbc] sm:$0xf]
    %v3117 = vld [vmem:[#allocation8 + $0xc0] sm:$0xf]
    %v3118 = vld [vmem:[#allocation8 + $0xc4] sm:$0xf]
    %v3119 = vld [vmem:[#allocation8 + $0xc8] sm:$0xf]
    %v3120 = vld [vmem:[#allocation8 + $0xcc] sm:$0xf]
    %v3121 = vld [vmem:[#allocation8 + $0xd0] sm:$0xf]
    %v3122 = vld [vmem:[#allocation8 + $0xd4] sm:$0xf]
    %v3123 = vld [vmem:[#allocation8 + $0xd8] sm:$0xf]
    %v3124 = vld [vmem:[#allocation8 + $0xdc] sm:$0xf]
    %v3125 = vld [vmem:[#allocation8 + $0xe0] sm:$0xf]
    %v3126 = vld [vmem:[#allocation8 + $0xe4] sm:$0xf]
    %v3127 = vld [vmem:[#allocation8 + $0xe8] sm:$0xf]
    %v3128 = vld [vmem:[#allocation8 + $0xec] sm:$0xf]
    %v3129 = vld [vmem:[#allocation8 + $0xf0] sm:$0xf]
    %v3130 = vld [vmem:[#allocation8 + $0xf4] sm:$0xf]
    %v3131 = vld [vmem:[#allocation8 + $0xf8] sm:$0xf]
    %v3132 = vld [vmem:[#allocation8 + $0xfc] sm:$0xf]
    %v3133 = vld [vmem:[#allocation10] sm:$0x1]
    %v3135 = vperm.slane %v3133, 0
    %v3201 = vunpack.c.l.b16 %v3069
    %v3202 = vunpack.c.l.b16 %v3070
    %v3203 = vunpack.c.l.b16 %v3071
    %v3204 = vunpack.c.l.b16 %v3072
    %v3205 = vunpack.c.l.b16 %v3073
    %v3206 = vunpack.c.l.b16 %v3074
    %v3207 = vunpack.c.l.b16 %v3075
    %v3208 = vunpack.c.l.b16 %v3076
    %v3209 = vunpack.c.l.b16 %v3077
    %v3210 = vunpack.c.l.b16 %v3078
    %v3211 = vunpack.c.l.b16 %v3079
    %v3212 = vunpack.c.l.b16 %v3080
    %v3213 = vunpack.c.l.b16 %v3081
    %v3214 = vunpack.c.l.b16 %v3082
    %v3215 = vunpack.c.l.b16 %v3083
    %v3216 = vunpack.c.l.b16 %v3084
    %v3217 = vunpack.c.l.b16 %v3085
    %v3218 = vunpack.c.l.b16 %v3086
    %v3219 = vunpack.c.l.b16 %v3087
    %v3220 = vunpack.c.l.b16 %v3088
    %v3221 = vunpack.c.l.b16 %v3089
    %v3222 = vunpack.c.l.b16 %v3090
    %v3223 = vunpack.c.l.b16 %v3091
    %v3224 = vunpack.c.l.b16 %v3092
    %v3225 = vunpack.c.l.b16 %v3093
    %v3226 = vunpack.c.l.b16 %v3094
    %v3227 = vunpack.c.l.b16 %v3095
    %v3228 = vunpack.c.l.b16 %v3096
    %v3229 = vunpack.c.l.b16 %v3097
    %v3230 = vunpack.c.l.b16 %v3098
    %v3231 = vunpack.c.l.b16 %v3099
    %v3232 = vunpack.c.l.b16 %v3100
    %v3233 = vunpack.c.l.b16 %v3101
    %v3234 = vunpack.c.l.b16 %v3102
    %v3235 = vunpack.c.l.b16 %v3103
    %v3236 = vunpack.c.l.b16 %v3104
    %v3237 = vunpack.c.l.b16 %v3105
    %v3238 = vunpack.c.l.b16 %v3106
    %v3239 = vunpack.c.l.b16 %v3107
    %v3240 = vunpack.c.l.b16 %v3108
    %v3241 = vunpack.c.l.b16 %v3109
    %v3242 = vunpack.c.l.b16 %v3110
    %v3243 = vunpack.c.l.b16 %v3111
    %v3244 = vunpack.c.l.b16 %v3112
    %v3245 = vunpack.c.l.b16 %v3113
    %v3246 = vunpack.c.l.b16 %v3114
    %v3247 = vunpack.c.l.b16 %v3115
    %v3248 = vunpack.c.l.b16 %v3116
    %v3249 = vunpack.c.l.b16 %v3117
    %v3250 = vunpack.c.l.b16 %v3118
    %v3251 = vunpack.c.l.b16 %v3119
    %v3252 = vunpack.c.l.b16 %v3120
    %v3253 = vunpack.c.l.b16 %v3121
    %v3254 = vunpack.c.l.b16 %v3122
    %v3255 = vunpack.c.l.b16 %v3123
    %v3256 = vunpack.c.l.b16 %v3124
    %v3257 = vunpack.c.l.b16 %v3125
    %v3258 = vunpack.c.l.b16 %v3126
    %v3259 = vunpack.c.l.b16 %v3127
    %v3260 = vunpack.c.l.b16 %v3128
    %v3261 = vunpack.c.l.b16 %v3129
    %v3262 = vunpack.c.l.b16 %v3130
    %v3263 = vunpack.c.l.b16 %v3131
    %v3264 = vunpack.c.l.b16 %v3132
    %v3265 = vpack.c.b16 %v3202, %v3201
    %v3266 = vpack.c.b16 %v3204, %v3203
    %v3267 = vpack.c.b16 %v3206, %v3205
    %v3268 = vpack.c.b16 %v3208, %v3207
    %v3269 = vpack.c.b16 %v3210, %v3209
    %v3270 = vpack.c.b16 %v3212, %v3211
    %v3271 = vpack.c.b16 %v3214, %v3213
    %v3272 = vpack.c.b16 %v3216, %v3215
    %v3273 = vpack.c.b16 %v3218, %v3217
    %v3274 = vpack.c.b16 %v3220, %v3219
    %v3275 = vpack.c.b16 %v3222, %v3221
    %v3276 = vpack.c.b16 %v3224, %v3223
    %v3277 = vpack.c.b16 %v3226, %v3225
    %v3278 = vpack.c.b16 %v3228, %v3227
    %v3279 = vpack.c.b16 %v3230, %v3229
    %v3280 = vpack.c.b16 %v3232, %v3231
    %v3281 = vpack.c.b16 %v3234, %v3233
    %v3282 = vpack.c.b16 %v3236, %v3235
    %v3283 = vpack.c.b16 %v3238, %v3237
    %v3284 = vpack.c.b16 %v3240, %v3239
    %v3285 = vpack.c.b16 %v3242, %v3241
    %v3286 = vpack.c.b16 %v3244, %v3243
    %v3287 = vpack.c.b16 %v3246, %v3245
    %v3288 = vpack.c.b16 %v3248, %v3247
    %v3289 = vpack.c.b16 %v3250, %v3249
    %v3290 = vpack.c.b16 %v3252, %v3251
    %v3291 = vpack.c.b16 %v3254, %v3253
    %v3292 = vpack.c.b16 %v3256, %v3255
    %v3293 = vpack.c.b16 %v3258, %v3257
    %v3294 = vpack.c.b16 %v3260, %v3259
    %v3295 = vpack.c.b16 %v3262, %v3261
    %v3296 = vpack.c.b16 %v3264, %v3263
    %3329 = vmatpush.bf16.msra.mxu0 %v3272
    %3330 = vmatpush.bf16.msra.mxu0 %v3271
    %3331 = vmatpush.bf16.msra.mxu0 %v3270
    %3332 = vmatpush.bf16.msra.mxu0 %v3269
    %3333 = vmatpush.bf16.msra.mxu0 %v3268
    %3334 = vmatpush.bf16.msra.mxu0 %v3267
    %3335 = vmatpush.bf16.msra.mxu0 %v3266
    %3336 = vmatpush.bf16.msra.mxu0 %v3265
    %3337 = vmatmul.bf16.gmra.mxu0 %v3065
    %v3338 = vpop.f32.mrf.mxu0
    %v3339 = vadd.f32 %v3135, %v3338
    %v3340 = vpop.f32.mrf.mxu0
    %3341 = vdwg.mxu0
    %3342 = vmatpush.bf16.msra.mxu0 %v3280
    %3343 = vmatpush.bf16.msra.mxu0 %v3279
    %3344 = vmatpush.bf16.msra.mxu0 %v3278
    %3345 = vmatpush.bf16.msra.mxu0 %v3277
    %3346 = vmatpush.bf16.msra.mxu0 %v3276
    %3347 = vmatpush.bf16.msra.mxu0 %v3275
    %3348 = vmatpush.bf16.msra.mxu0 %v3274
    %3349 = vmatpush.bf16.msra.mxu0 %v3273
    %3350 = vmatmul.bf16.gmra.mxu0 %v3066
    %v3351 = vpop.f32.mrf.mxu0
    %v3352 = vadd.f32 %v3339, %v3351
    %v3353 = vpop.f32.mrf.mxu0
    %3354 = vdwg.mxu0
    %3355 = vmatpush.bf16.msra.mxu0 %v3288
    %3356 = vmatpush.bf16.msra.mxu0 %v3287
    %3357 = vmatpush.bf16.msra.mxu0 %v3286
    %3358 = vmatpush.bf16.msra.mxu0 %v3285
    %3359 = vmatpush.bf16.msra.mxu0 %v3284
    %3360 = vmatpush.bf16.msra.mxu0 %v3283
    %3361 = vmatpush.bf16.msra.mxu0 %v3282
    %3362 = vmatpush.bf16.msra.mxu0 %v3281
    %3363 = vmatmul.bf16.gmra.mxu0 %v3067
    %v3364 = vpop.f32.mrf.mxu0
    %v3365 = vadd.f32 %v3352, %v3364
    %v3366 = vpop.f32.mrf.mxu0
    %3367 = vdwg.mxu0
    %3368 = vmatpush.bf16.msra.mxu0 %v3296
    %3369 = vmatpush.bf16.msra.mxu0 %v3295
    %3370 = vmatpush.bf16.msra.mxu0 %v3294
    %3371 = vmatpush.bf16.msra.mxu0 %v3293
    %3372 = vmatpush.bf16.msra.mxu0 %v3292
    %3373 = vmatpush.bf16.msra.mxu0 %v3291
    %3374 = vmatpush.bf16.msra.mxu0 %v3290
    %3375 = vmatpush.bf16.msra.mxu0 %v3289
    %3376 = vmatmul.bf16.gmra.mxu0 %v3068
    %v3377 = vpop.f32.mrf.mxu0
    %v3378 = vadd.f32 %v3365, %v3377
    %v3379 = vpop.f32.mrf.mxu0
    %3380 = vdwg.mxu0
    %3381 = vst [vmem:[#allocation11] sm:$0x3] %v3378
    // Predicated region
    $region42: #{tpu_custom_call.1} parent=1 // pred_check
      _
    $region43: #{tpu_custom_call.1} parent=1 // pred_check_branch
      %3383 = sbr.rel (0) target = $region45
    $region44: #{tpu_custom_call.1} parent=1 // pred_region
      %3385 = vsyncadd [#allocation4], 0
      %s3387 = sshll.u32 [#allocation11], 4
      %s3388 = int_to_ptr.vmem [resolvable:$true] %s3387
      %s3389 = sshll.u32 %s5, 4
      %s3390 = int_to_ptr.hbm [resolvable:$true] %s3389
      %3392 = dma.vmem_to_hbm [thread:$0]  %s3388, 32, %s3390, [#allocation4]
    $region45: #{tpu_custom_call.1} parent=1 // pred_fallthru
      _
    // Predicated region
    $region46: #{tpu_custom_call.1} parent=1 // pred_check
      _
    $region47: #{tpu_custom_call.1} parent=1 // pred_check_branch
      %3394 = sbr.rel (0) target = $region49
    $region48: #{tpu_custom_call.1} parent=1 // pred_region
      %3396 = dma.done [#allocation4], 32
    $region49: #{tpu_custom_call.1} parent=1 // pred_fallthru
      _
    %3397 = vsyncpa [#allocation3], 1
    %3398 = vsyncpa [#allocation6], 1
    %3399 = vsyncpa [#allocation9], 1
    %3400 = vsyncpa [#allocation4], 1

</llo_original>
